<compile_context>
chip_gen: v7x
topology: tpu7x:2x2x1
jax: 0.10.0
libtpu: 0.0.40
codegen_flags: <defaults>
</compile_context>

<pallas_src>
import jax
import jax.numpy as jnp
from jax.experimental import pallas as pl
from jax.experimental.pallas import tpu as pltpu


def _autoencoder_kernel(x_ref, w_enc_ref, b_enc_ref, w_dec_ref, b_dec_ref, out_ref):
    # x block: (tb, pack*D) lane-dense. Weights/biases are VMEM-resident across
    # all grid steps (index_map always returns block (0, 0)).
    x = x_ref[...].astype(jnp.float32)
    # encoded = relu(x @ W_enc + b_enc)   (block-diagonal W_enc when packed)
    h = jnp.dot(x, w_enc_ref[...], preferred_element_type=jnp.float32) + b_enc_ref[...]
    h = jnp.maximum(h, 0.0)
    # decoded = sigmoid(h @ W_dec + b_dec)
    y = jnp.dot(h, w_dec_ref[...], preferred_element_type=jnp.float32) + b_dec_ref[...]
    out_ref[...] = jax.nn.sigmoid(y).astype(out_ref.dtype)


def _round_up(n, m):
    return ((n + m - 1) // m) * m


def _block_diag(w, pack):
    """(din, dout) -> (pack*din, pack*dout) block-diagonal replication of w."""
    din, dout = w.shape
    eye = jnp.eye(pack, dtype=w.dtype)
    return jnp.einsum("pq,io->piqo", eye, w).reshape(pack * din, pack * dout)


def autoencoder_forward(
    x, w_enc, b_enc, w_dec, b_dec, *,
    vmem_stream_budget=16 << 20,   # bytes of VMEM for the double-buffered x/out streams
    target_grid_steps=8,           # keep several "parallel" steps so v7x's 2 TCs can split work
    min_pallas_batch=1024,         # below this, a fused XLA expression is strictly faster
):
    """x: (B, D); w_enc: (D, E); b_enc: (1, E); w_dec: (E, D); b_dec: (1, D).

    Weight layout is (in_features, out_features) (PyTorch W.T), so the forward is
    sigmoid(relu(x @ W_enc + b_enc) @ W_dec + b_dec).
    """
    B, D = x.shape
    E = w_enc.shape[1]

    # ---- Small-batch fallback: kernel launch / pipeline overhead dominates. ----
    if B < min_pallas_batch:
        h = jnp.maximum(x.astype(jnp.float32) @ w_enc + b_enc.reshape(1, E), 0.0)
        y = jax.nn.sigmoid(h @ w_dec + b_dec.reshape(1, D))
        return y.astype(x.dtype)

    # ---- Lane-dense packing: `pack` samples per streamed row (pack*D == 128). ----
    pack = (128 // D) if (D <= 128 and 128 % D == 0) else 1

    B_pad = _round_up(B, pack)          # pad only to a whole packed row (<= pack-1 rows)
    if B_pad != B:
        x = jnp.pad(x, ((0, B_pad - B), (0, 0)))

    n_rows = B_pad // pack
    W = pack * D                        # streamed minor dim (128 for D=16)
    H = pack * E                        # hidden minor dim (kernel-internal only)
    x_packed = x.reshape(n_rows, W)     # free row-major reshape, no data movement

    if pack > 1:
        w_enc_k = _block_diag(w_enc, pack)              # (pack*D, pack*E)
        w_dec_k = _block_diag(w_dec, pack)              # (pack*E, pack*D)
        b_enc_k = jnp.tile(b_enc.reshape(1, E), (1, pack))
        b_dec_k = jnp.tile(b_dec.reshape(1, D), (1, pack))
    else:
        w_enc_k, w_dec_k = w_enc, w_dec
        b_enc_k = b_enc.reshape(1, E)
        b_dec_k = b_dec.reshape(1, D)

    # ---- Batch-tile sizing from the VMEM budget (2 streams x double buffer). ----
    row_bytes = W * x.dtype.itemsize
    tb_vmem = max(32, (vmem_stream_budget // (4 * row_bytes)) // 32 * 32)
    tb_split = _round_up(pl.cdiv(n_rows, target_grid_steps), 32)
    tb = min(tb_vmem, max(tb_split, 512))       # >=512 rows to amortize step overhead
    tb = min(tb, _round_up(n_rows, 32))
    tb = max(32, (tb // 32) * 32)
    grid = (pl.cdiv(n_rows, tb),)               # ragged last tile is masked by Pallas

    out_packed = pl.pallas_call(
        _autoencoder_kernel,
        out_shape=jax.ShapeDtypeStruct((n_rows, W), x.dtype),
        grid=grid,
        in_specs=[
            # x: tiled along the (packed) batch axis -> pipelined DMA in.
            pl.BlockSpec((tb, W), lambda i: (i, 0)),
            # Weights / biases: full blocks, resident in VMEM for all grid steps.
            pl.BlockSpec(w_enc_k.shape, lambda i: (0, 0)),
            pl.BlockSpec((1, H), lambda i: (0, 0)),
            pl.BlockSpec(w_dec_k.shape, lambda i: (0, 0)),
            pl.BlockSpec((1, W), lambda i: (0, 0)),
        ],
        out_specs=pl.BlockSpec((tb, W), lambda i: (i, 0)),
        compiler_params=pltpu.CompilerParams(
            dimension_semantics=("parallel",),
            vmem_limit_bytes=32 * 1024 * 1024,   # safe on v5e/v6e/v7x; raises v5e's 16 MiB default
        ),
    )(x_packed, w_enc_k, b_enc_k, w_dec_k, b_dec_k)

    out = out_packed.reshape(B_pad, D)
    return out[:B] if B_pad != B else out


if __name__ == "__main__":
    # Shapes consistent with the module: tabular input, encoding_dim = 4.
    batch = 4096          # large enough to take the Pallas path (lane-dense, tiled batch)
    input_dim = 16
    encoding_dim = 4

    key = jax.random.PRNGKey(0)
    kx, k1, k2, k3, k4 = jax.random.split(key, 5)

    # Deterministic "standardized" input (StandardScaler output is ~N(0,1)).
    x = jax.random.normal(kx, (batch, input_dim), dtype=jnp.float32)

    # PyTorch nn.Linear(in, out): weight (out, in), bias (out,), U(-1/sqrt(in), 1/sqrt(in)).
    # We store the transposed weight (in, out) for the kernel.
    bound_enc = 1.0 / jnp.sqrt(jnp.float32(input_dim))
    bound_dec = 1.0 / jnp.sqrt(jnp.float32(encoding_dim))
    w_enc = jax.random.uniform(k1, (input_dim, encoding_dim), jnp.float32, -bound_enc, bound_enc)
    b_enc = jax.random.uniform(k2, (1, encoding_dim), jnp.float32, -bound_enc, bound_enc)
    w_dec = jax.random.uniform(k3, (encoding_dim, input_dim), jnp.float32, -bound_dec, bound_dec)
    b_dec = jax.random.uniform(k4, (1, input_dim), jnp.float32, -bound_dec, bound_dec)

    # Plain JAX reference.
    h_ref = jnp.maximum(x @ w_enc + b_enc, 0.0)
    y_ref = jax.nn.sigmoid(h_ref @ w_dec + b_dec)

    # 1) Main Pallas path (lane-dense packed, batch-tiled).
    out = autoencoder_forward(x, w_enc, b_enc, w_dec, b_dec)
    jax.block_until_ready(out)
    assert out.shape == (batch, input_dim)
    assert jnp.allclose(out, y_ref, atol=1e-4, rtol=1e-4)

    # 2) Ragged batch (not a multiple of 8): pad-to-8 + ragged last tile + slice back.
    b_rag = 2053
    out_rag = autoencoder_forward(x[:b_rag], w_enc, b_enc, w_dec, b_dec)
    jax.block_until_ready(out_rag)
    assert out_rag.shape == (b_rag, input_dim)
    assert jnp.allclose(out_rag, y_ref[:b_rag], atol=1e-4, rtol=1e-4)

    # 3) Tiny batch: fused-XLA fallback path.
    out_small = autoencoder_forward(x[:8], w_enc, b_enc, w_dec, b_dec)
    jax.block_until_ready(out_small)
    assert jnp.allclose(out_small, y_ref[:8], atol=1e-4, rtol=1e-4)

    print("KERNEL_OK")
</pallas_src>

<mosaic_0001>
module attributes {stable_mosaic.version = 11 : i64} {
  func.func @_autoencoder_kernel(%arg0: i32, %arg1: memref<512x128xf32, #tpu.memory_space<vmem>>, %arg2: memref<128x32xf32, #tpu.memory_space<vmem>>, %arg3: memref<1x32xf32, #tpu.memory_space<vmem>>, %arg4: memref<32x128xf32, #tpu.memory_space<vmem>>, %arg5: memref<1x128xf32, #tpu.memory_space<vmem>>, %arg6: memref<512x128xf32, #tpu.memory_space<vmem>>) attributes {dimension_semantics = [#tpu.dimension_semantics<parallel>], iteration_bounds = array<i64: 1>, scalar_prefetch = 0 : i64, scratch_operands = 0 : i64, tpu.core_type = #tpu.core_type<tc>, window_params = [{transform_indices = @transform_0, window_bounds = array<i64: 512, 128>}, {pipeline_mode = #tpu.pipeline_mode<synchronous>, transform_indices = @transform_1, window_bounds = array<i64: 128, 32>}, {pipeline_mode = #tpu.pipeline_mode<synchronous>, transform_indices = @transform_2, window_bounds = array<i64: 1, 32>}, {pipeline_mode = #tpu.pipeline_mode<synchronous>, transform_indices = @transform_3, window_bounds = array<i64: 32, 128>}, {pipeline_mode = #tpu.pipeline_mode<synchronous>, transform_indices = @transform_4, window_bounds = array<i64: 1, 128>}, {transform_indices = @transform_5, window_bounds = array<i64: 512, 128>}]} {
    %c0 = arith.constant 0 : index
    %c0_0 = arith.constant 0 : index
    %0 = vector.load %arg1[%c0, %c0_0] : memref<512x128xf32, #tpu.memory_space<vmem>>, vector<512x128xf32>
    %c0_1 = arith.constant 0 : index
    %c0_2 = arith.constant 0 : index
    %1 = vector.load %arg2[%c0_1, %c0_2] : memref<128x32xf32, #tpu.memory_space<vmem>>, vector<128x32xf32>
    %cst = arith.constant dense<0.000000e+00> : vector<512x32xf32>
    %2 = tpu.matmul %0, %1, %cst {dimension_numbers = #tpu.dot_dimension_numbers<[1], [0], [0], [1], [0, 0, 1, 1], [], []>} : vector<512x128xf32>, vector<128x32xf32>, vector<512x32xf32> -> vector<512x32xf32>
    %c0_3 = arith.constant 0 : index
    %c0_4 = arith.constant 0 : index
    %3 = vector.load %arg3[%c0_3, %c0_4] : memref<1x32xf32, #tpu.memory_space<vmem>>, vector<1x32xf32>
    %4 = vector.broadcast %3 : vector<1x32xf32> to vector<512x32xf32>
    %5 = arith.addf %2, %4 : vector<512x32xf32>
    %cst_5 = arith.constant 0.000000e+00 : f32
    %6 = vector.broadcast %cst_5 : f32 to vector<512x32xf32>
    %7 = arith.maximumf %5, %6 : vector<512x32xf32>
    %c0_6 = arith.constant 0 : index
    %c0_7 = arith.constant 0 : index
    %8 = vector.load %arg4[%c0_6, %c0_7] : memref<32x128xf32, #tpu.memory_space<vmem>>, vector<32x128xf32>
    %cst_8 = arith.constant dense<0.000000e+00> : vector<512x128xf32>
    %9 = tpu.matmul %7, %8, %cst_8 {dimension_numbers = #tpu.dot_dimension_numbers<[1], [0], [0], [1], [0, 0, 1, 1], [], []>} : vector<512x32xf32>, vector<32x128xf32>, vector<512x128xf32> -> vector<512x128xf32>
    %c0_9 = arith.constant 0 : index
    %c0_10 = arith.constant 0 : index
    %10 = vector.load %arg5[%c0_9, %c0_10] : memref<1x128xf32, #tpu.memory_space<vmem>>, vector<1x128xf32>
    %11 = vector.broadcast %10 : vector<1x128xf32> to vector<512x128xf32>
    %12 = arith.addf %9, %11 : vector<512x128xf32>
    %13 = arith.negf %12 : vector<512x128xf32>
    %14 = math.exp %13 : vector<512x128xf32>
    %cst_11 = arith.constant 1.000000e+00 : f32
    %15 = vector.broadcast %cst_11 : f32 to vector<512x128xf32>
    %16 = arith.addf %15, %14 : vector<512x128xf32>
    %17 = arith.divf %15, %16 : vector<512x128xf32>
    %c0_12 = arith.constant 0 : index
    %c0_13 = arith.constant 0 : index
    %18 = vector.load %arg6[%c0_12, %c0_13] : memref<512x128xf32, #tpu.memory_space<vmem>>, vector<512x128xf32>
    tpu.vector_store %arg6[%c0_12, %c0_13], %17 {strides = array<i32>} : memref<512x128xf32, #tpu.memory_space<vmem>>, vector<512x128xf32>,
    return
  }
  func.func @transform_0(%arg0: i32) -> (i32, i32) {
    %c0_i32 = arith.constant 0 : i32
    %c0_i32_0 = arith.constant 0 : i32
    return %arg0, %c0_i32 : i32, i32
  }
  func.func @transform_1(%arg0: i32) -> (i32, i32) {
    %c0_i32 = arith.constant 0 : i32
    %c0_i32_0 = arith.constant 0 : i32
    %c0_i32_1 = arith.constant 0 : i32
    return %c0_i32, %c0_i32_0 : i32, i32
  }
  func.func @transform_2(%arg0: i32) -> (i32, i32) {
    %c0_i32 = arith.constant 0 : i32
    %c0_i32_0 = arith.constant 0 : i32
    %c0_i32_1 = arith.constant 0 : i32
    return %c0_i32, %c0_i32_0 : i32, i32
  }
  func.func @transform_3(%arg0: i32) -> (i32, i32) {
    %c0_i32 = arith.constant 0 : i32
    %c0_i32_0 = arith.constant 0 : i32
    %c0_i32_1 = arith.constant 0 : i32
    return %c0_i32, %c0_i32_0 : i32, i32
  }
  func.func @transform_4(%arg0: i32) -> (i32, i32) {
    %c0_i32 = arith.constant 0 : i32
    %c0_i32_0 = arith.constant 0 : i32
    %c0_i32_1 = arith.constant 0 : i32
    return %c0_i32, %c0_i32_0 : i32, i32
  }
  func.func @transform_5(%arg0: i32) -> (i32, i32) {
    %c0_i32 = arith.constant 0 : i32
    %c0_i32_0 = arith.constant 0 : i32
    return %arg0, %c0_i32 : i32, i32
  }
}

</mosaic_0001>

<llo_original>
// kernel: tpu_custom_call.1
$region0: #{tpu_custom_call.1}
  #allocation0 [shape = 'u32[]', space=smem, size = 0x4, offset = 0x4, fixed_abs, tag = 'smem constant byte address 0x4 - core index']
  #allocation1 [shape = 'u32[144,128]{1,0:T(1,128)}', space=vmem, size = 0x12000, scoped, tag = 'internal scratch']
  %s0 = inlined_call_operand.hbm [shape: f32[512,128], index: 0, kind: input, shape index: {}]
  %s1 = inlined_call_operand.vmem [shape: f32[128,32], index: 1, kind: input, shape index: {}]
  %s2 = inlined_call_operand.vmem [shape: f32[1,32], index: 2, kind: input, shape index: {}]
  %s3 = inlined_call_operand.vmem [shape: f32[32,128], index: 3, kind: input, shape index: {}]
  %s4 = inlined_call_operand.vmem [shape: f32[1,128], index: 4, kind: input, shape index: {}]
  %s5 = inlined_call_operand.hbm [shape: f32[512,128], index: 5, kind: output, shape index: {}]
  %s6 = sld [smem:[#allocation0]]
  $region34: #{tpu_custom_call.1} parent=0
    _
  %s8 = ssub.s32 1, %s6
  %s9 = scalar_select 0, %s8, %s6
  $region1: #{tpu_custom_call.1} parent=0
    #allocation2 [shape = 'u8[262144]{0}', space=vmem, size = 0x40000, scoped, tag = 'input window, operand 0, single buffered']
    #allocation3 [shape = 's32[1]{0}', space=sflag, size = 0x4, scoped, tag = 'scoped memory for tpu_custom_call.1']
    #allocation4 [shape = 's32[1]{0}', space=sflag, size = 0x4, scoped, tag = 'scoped memory for tpu_custom_call.1']
    #allocation5 [shape = 'u8[262144]{0}', space=vmem, size = 0x40000, scoped, tag = 'output window, operand 0, single buffered']
    %10 = vsyncpa [#allocation3], 0
    %11 = vsyncpa [#allocation4], 0
    // Predicated region
    $region2: #{tpu_custom_call.1} parent=1 // pred_check
      _
    $region3: #{tpu_custom_call.1} parent=1 // pred_check_branch
      %13 = sbr.rel (0) target = $region5
    $region4: #{tpu_custom_call.1} parent=1 // pred_region
      %s15 = ssub.s32 8192, 8192
      %16 = vsyncadd [#allocation3], %s15
      %s17 = sshll.u32 [#allocation2], 4
      %s18 = int_to_ptr.vmem [resolvable:$true] %s17
      %23 = dma.hbm_to_vmem [thread:$0]  %s0, 8192, %s18, [#allocation3], 128, 128, 8
    $region5: #{tpu_custom_call.1} parent=1 // pred_fallthru
      _
    // Predicated region
    $region6: #{tpu_custom_call.1} parent=1 // pred_check
      _
    $region7: #{tpu_custom_call.1} parent=1 // pred_check_branch
      %25 = sbr.rel (0) target = $region9
    $region8: #{tpu_custom_call.1} parent=1 // pred_region
      _
    $region9: #{tpu_custom_call.1} parent=1 // pred_fallthru
      _
    // Predicated region
    $region10: #{tpu_custom_call.1} parent=1 // pred_check
      _
    $region11: #{tpu_custom_call.1} parent=1 // pred_check_branch
      %27 = sbr.rel (0) target = $region13
    $region12: #{tpu_custom_call.1} parent=1 // pred_region
      _
    $region13: #{tpu_custom_call.1} parent=1 // pred_fallthru
      _
    // Predicated region
    $region14: #{tpu_custom_call.1} parent=1 // pred_check
      _
    $region15: #{tpu_custom_call.1} parent=1 // pred_check_branch
      %29 = sbr.rel (0) target = $region17
    $region16: #{tpu_custom_call.1} parent=1 // pred_region
      _
    $region17: #{tpu_custom_call.1} parent=1 // pred_fallthru
      _
    // Predicated region
    $region18: #{tpu_custom_call.1} parent=1 // pred_check
      _
    $region19: #{tpu_custom_call.1} parent=1 // pred_check_branch
      %31 = sbr.rel (0) target = $region21
    $region20: #{tpu_custom_call.1} parent=1 // pred_region
      _
    $region21: #{tpu_custom_call.1} parent=1 // pred_fallthru
      _
    // Predicated region
    $region22: #{tpu_custom_call.1} parent=1 // pred_check
      _
    $region23: #{tpu_custom_call.1} parent=1 // pred_check_branch
      %33 = sbr.rel (0) target = $region25
    $region24: #{tpu_custom_call.1} parent=1 // pred_region
      %34 = dma.done [#allocation3], 8192
    $region25: #{tpu_custom_call.1} parent=1 // pred_fallthru
      _
    %v35 = vld [vmem:[#allocation2] sm:$0xff]
    %v36 = vld [vmem:[#allocation2 + $0x8] sm:$0xff]
    %v37 = vld [vmem:[#allocation2 + $0x10] sm:$0xff]
    %v38 = vld [vmem:[#allocation2 + $0x18] sm:$0xff]
    %v39 = vld [vmem:[#allocation2 + $0x20] sm:$0xff]
    %v40 = vld [vmem:[#allocation2 + $0x28] sm:$0xff]
    %v41 = vld [vmem:[#allocation2 + $0x30] sm:$0xff]
    %v42 = vld [vmem:[#allocation2 + $0x38] sm:$0xff]
    %v43 = vld [vmem:[#allocation2 + $0x40] sm:$0xff]
    %v44 = vld [vmem:[#allocation2 + $0x48] sm:$0xff]
    %v45 = vld [vmem:[#allocation2 + $0x50] sm:$0xff]
    %v46 = vld [vmem:[#allocation2 + $0x58] sm:$0xff]
    %v47 = vld [vmem:[#allocation2 + $0x60] sm:$0xff]
    %v48 = vld [vmem:[#allocation2 + $0x68] sm:$0xff]
    %v49 = vld [vmem:[#allocation2 + $0x70] sm:$0xff]
    %v50 = vld [vmem:[#allocation2 + $0x78] sm:$0xff]
    %v51 = vld [vmem:[#allocation2 + $0x80] sm:$0xff]
    %v52 = vld [vmem:[#allocation2 + $0x88] sm:$0xff]
    %v53 = vld [vmem:[#allocation2 + $0x90] sm:$0xff]
    %v54 = vld [vmem:[#allocation2 + $0x98] sm:$0xff]
    %v55 = vld [vmem:[#allocation2 + $0xa0] sm:$0xff]
    %v56 = vld [vmem:[#allocation2 + $0xa8] sm:$0xff]
    %v57 = vld [vmem:[#allocation2 + $0xb0] sm:$0xff]
    %v58 = vld [vmem:[#allocation2 + $0xb8] sm:$0xff]
    %v59 = vld [vmem:[#allocation2 + $0xc0] sm:$0xff]
    %v60 = vld [vmem:[#allocation2 + $0xc8] sm:$0xff]
    %v61 = vld [vmem:[#allocation2 + $0xd0] sm:$0xff]
    %v62 = vld [vmem:[#allocation2 + $0xd8] sm:$0xff]
    %v63 = vld [vmem:[#allocation2 + $0xe0] sm:$0xff]
    %v64 = vld [vmem:[#allocation2 + $0xe8] sm:$0xff]
    %v65 = vld [vmem:[#allocation2 + $0xf0] sm:$0xff]
    %v66 = vld [vmem:[#allocation2 + $0xf8] sm:$0xff]
    %v67 = vld [vmem:[#allocation2 + $0x100] sm:$0xff]
    %v68 = vld [vmem:[#allocation2 + $0x108] sm:$0xff]
    %v69 = vld [vmem:[#allocation2 + $0x110] sm:$0xff]
    %v70 = vld [vmem:[#allocation2 + $0x118] sm:$0xff]
    %v71 = vld [vmem:[#allocation2 + $0x120] sm:$0xff]
    %v72 = vld [vmem:[#allocation2 + $0x128] sm:$0xff]
    %v73 = vld [vmem:[#allocation2 + $0x130] sm:$0xff]
    %v74 = vld [vmem:[#allocation2 + $0x138] sm:$0xff]
    %v75 = vld [vmem:[#allocation2 + $0x140] sm:$0xff]
    %v76 = vld [vmem:[#allocation2 + $0x148] sm:$0xff]
    %v77 = vld [vmem:[#allocation2 + $0x150] sm:$0xff]
    %v78 = vld [vmem:[#allocation2 + $0x158] sm:$0xff]
    %v79 = vld [vmem:[#allocation2 + $0x160] sm:$0xff]
    %v80 = vld [vmem:[#allocation2 + $0x168] sm:$0xff]
    %v81 = vld [vmem:[#allocation2 + $0x170] sm:$0xff]
    %v82 = vld [vmem:[#allocation2 + $0x178] sm:$0xff]
    %v83 = vld [vmem:[#allocation2 + $0x180] sm:$0xff]
    %v84 = vld [vmem:[#allocation2 + $0x188] sm:$0xff]
    %v85 = vld [vmem:[#allocation2 + $0x190] sm:$0xff]
    %v86 = vld [vmem:[#allocation2 + $0x198] sm:$0xff]
    %v87 = vld [vmem:[#allocation2 + $0x1a0] sm:$0xff]
    %v88 = vld [vmem:[#allocation2 + $0x1a8] sm:$0xff]
    %v89 = vld [vmem:[#allocation2 + $0x1b0] sm:$0xff]
    %v90 = vld [vmem:[#allocation2 + $0x1b8] sm:$0xff]
    %v91 = vld [vmem:[#allocation2 + $0x1c0] sm:$0xff]
    %v92 = vld [vmem:[#allocation2 + $0x1c8] sm:$0xff]
    %v93 = vld [vmem:[#allocation2 + $0x1d0] sm:$0xff]
    %v94 = vld [vmem:[#allocation2 + $0x1d8] sm:$0xff]
    %v95 = vld [vmem:[#allocation2 + $0x1e0] sm:$0xff]
    %v96 = vld [vmem:[#allocation2 + $0x1e8] sm:$0xff]
    %v97 = vld [vmem:[#allocation2 + $0x1f0] sm:$0xff]
    %v98 = vld [vmem:[#allocation2 + $0x1f8] sm:$0xff]
    %v99 = vld [vmem:[%s1] sm:$0xff]
    %v100 = vld [vmem:[%s1 + $0x8] sm:$0xff]
    %v101 = vld [vmem:[%s1 + $0x10] sm:$0xff]
    %v102 = vld [vmem:[%s1 + $0x18] sm:$0xff]
    %v103 = vld [vmem:[%s1 + $0x20] sm:$0xff]
    %v104 = vld [vmem:[%s1 + $0x28] sm:$0xff]
    %v105 = vld [vmem:[%s1 + $0x30] sm:$0xff]
    %v106 = vld [vmem:[%s1 + $0x38] sm:$0xff]
    %v107 = vld [vmem:[%s1 + $0x40] sm:$0xff]
    %v108 = vld [vmem:[%s1 + $0x48] sm:$0xff]
    %v109 = vld [vmem:[%s1 + $0x50] sm:$0xff]
    %v110 = vld [vmem:[%s1 + $0x58] sm:$0xff]
    %v111 = vld [vmem:[%s1 + $0x60] sm:$0xff]
    %v112 = vld [vmem:[%s1 + $0x68] sm:$0xff]
    %v113 = vld [vmem:[%s1 + $0x70] sm:$0xff]
    %v114 = vld [vmem:[%s1 + $0x78] sm:$0xff]
    %v115 = vld [vmem:[%s2] sm:$0x1]
    %v117 = vlaneseq
    %v118 = vshrl.u32 %v117, 7
    %v119 = vsub.s32 0, %v118
    %v120 = vrot.slane %v115, %v119
    %122 = vmatprep.subr.mxu0 0.0
    %123 = vmatpush1.msra.mxu0 %v99
    %124 = vmatprep.subr.mxu0 0.0
    %125 = vmatpush1.msra.mxu0 %v100
    %126 = vmatprep.subr.mxu0 0.0
    %127 = vmatpush1.msra.mxu0 %v101
    %128 = vmatprep.subr.mxu0 0.0
    %129 = vmatpush1.msra.mxu0 %v102
    %130 = vmatprep.subr.mxu0 0.0
    %131 = vmatpush1.msra.mxu0 %v103
    %132 = vmatprep.subr.mxu0 0.0
    %133 = vmatpush1.msra.mxu0 %v104
    %134 = vmatprep.subr.mxu0 0.0
    %135 = vmatpush1.msra.mxu0 %v105
    %136 = vmatprep.subr.mxu0 0.0
    %137 = vmatpush1.msra.mxu0 %v106
    %138 = vmatprep.subr.mxu0 0.0
    %139 = vmatpush1.msra.mxu0 %v107
    %140 = vmatprep.subr.mxu0 0.0
    %141 = vmatpush1.msra.mxu0 %v108
    %142 = vmatprep.subr.mxu0 0.0
    %143 = vmatpush1.msra.mxu0 %v109
    %144 = vmatprep.subr.mxu0 0.0
    %145 = vmatpush1.msra.mxu0 %v110
    %146 = vmatprep.subr.mxu0 0.0
    %147 = vmatpush1.msra.mxu0 %v111
    %148 = vmatprep.subr.mxu0 0.0
    %149 = vmatpush1.msra.mxu0 %v112
    %150 = vmatprep.subr.mxu0 0.0
    %151 = vmatpush1.msra.mxu0 %v113
    %152 = vmatprep.subr.mxu0 0.0
    %153 = vmatpush1.msra.mxu0 %v114
    %154 = vmatprep.subr.mxu0 0.0
    %155 = vmatpush1.msra.mxu0 0.0
    %156 = vmatprep.subr.mxu0 0.0
    %157 = vmatpush1.msra.mxu0 0.0
    %158 = vmatprep.subr.mxu0 0.0
    %159 = vmatpush1.msra.mxu0 0.0
    %160 = vmatprep.subr.mxu0 0.0
    %161 = vmatpush1.msra.mxu0 0.0
    %162 = vmatprep.subr.mxu0 0.0
    %163 = vmatpush1.msra.mxu0 0.0
    %164 = vmatprep.subr.mxu0 0.0
    %165 = vmatpush1.msra.mxu0 0.0
    %166 = vmatprep.subr.mxu0 0.0
    %167 = vmatpush1.msra.mxu0 0.0
    %168 = vmatprep.subr.mxu0 0.0
    %169 = vmatpush1.msra.mxu0 0.0
    %170 = vmatprep.subr.mxu0 0.0
    %171 = vmatpush1.msra.mxu0 0.0
    %172 = vmatprep.subr.mxu0 0.0
    %173 = vmatpush1.msra.mxu0 0.0
    %174 = vmatprep.subr.mxu0 0.0
    %175 = vmatpush1.msra.mxu0 0.0
    %176 = vmatprep.subr.mxu0 0.0
    %177 = vmatpush1.msra.mxu0 0.0
    %178 = vmatprep.subr.mxu0 0.0
    %179 = vmatpush1.msra.mxu0 0.0
    %180 = vmatprep.subr.mxu0 0.0
    %181 = vmatpush1.msra.mxu0 0.0
    %182 = vmatprep.subr.mxu0 0.0
    %183 = vmatpush1.msra.mxu0 0.0
    %184 = vmatprep.subr.mxu0 0.0
    %185 = vmatpush1.msra.mxu0 0.0
    %186 = vmatprep.mubr.f32.mxu0 0.0
    %187 = vmatmul.mubr.f32.gmra.mrb[0].mxu0 %v35
    %v188 = vpop.f32.mrb[0].mxu0
    %v189 = vadd.f32 %v120, %v188
    %v190 = vpop.f32.mrb[0].mxu0
    %191 = vmatprep.mubr.f32.mxu0 0.0
    %192 = vmatmul.mubr.f32.gmra.mrb[0].mxu0 %v36
    %v193 = vpop.f32.mrb[0].mxu0
    %v194 = vadd.f32 %v120, %v193
    %v195 = vpop.f32.mrb[0].mxu0
    %196 = vmatprep.mubr.f32.mxu0 0.0
    %197 = vmatmul.mubr.f32.gmra.mrb[0].mxu0 %v37
    %v198 = vpop.f32.mrb[0].mxu0
    %v199 = vadd.f32 %v120, %v198
    %v200 = vpop.f32.mrb[0].mxu0
    %201 = vmatprep.mubr.f32.mxu0 0.0
    %202 = vmatmul.mubr.f32.gmra.mrb[0].mxu0 %v38
    %v203 = vpop.f32.mrb[0].mxu0
    %v204 = vadd.f32 %v120, %v203
    %v205 = vpop.f32.mrb[0].mxu0
    %206 = vmatprep.mubr.f32.mxu0 0.0
    %207 = vmatmul.mubr.f32.gmra.mrb[0].mxu0 %v39
    %v208 = vpop.f32.mrb[0].mxu0
    %v209 = vadd.f32 %v120, %v208
    %v210 = vpop.f32.mrb[0].mxu0
    %211 = vmatprep.mubr.f32.mxu0 0.0
    %212 = vmatmul.mubr.f32.gmra.mrb[0].mxu0 %v40
    %v213 = vpop.f32.mrb[0].mxu0
    %v214 = vadd.f32 %v120, %v213
    %v215 = vpop.f32.mrb[0].mxu0
    %216 = vmatprep.mubr.f32.mxu0 0.0
    %217 = vmatmul.mubr.f32.gmra.mrb[0].mxu0 %v41
    %v218 = vpop.f32.mrb[0].mxu0
    %v219 = vadd.f32 %v120, %v218
    %v220 = vpop.f32.mrb[0].mxu0
    %221 = vmatprep.mubr.f32.mxu0 0.0
    %222 = vmatmul.mubr.f32.gmra.mrb[0].mxu0 %v42
    %v223 = vpop.f32.mrb[0].mxu0
    %v224 = vadd.f32 %v120, %v223
    %v225 = vpop.f32.mrb[0].mxu0
    %226 = vmatprep.mubr.f32.mxu0 0.0
    %227 = vmatmul.mubr.f32.gmra.mrb[0].mxu0 %v43
    %v228 = vpop.f32.mrb[0].mxu0
    %v229 = vadd.f32 %v120, %v228
    %v230 = vpop.f32.mrb[0].mxu0
    %231 = vmatprep.mubr.f32.mxu0 0.0
    %232 = vmatmul.mubr.f32.gmra.mrb[0].mxu0 %v44
    %v233 = vpop.f32.mrb[0].mxu0
    %v234 = vadd.f32 %v120, %v233
    %v235 = vpop.f32.mrb[0].mxu0
    %236 = vmatprep.mubr.f32.mxu0 0.0
    %237 = vmatmul.mubr.f32.gmra.mrb[0].mxu0 %v45
    %v238 = vpop.f32.mrb[0].mxu0
    %v239 = vadd.f32 %v120, %v238
    %v240 = vpop.f32.mrb[0].mxu0
    %241 = vmatprep.mubr.f32.mxu0 0.0
    %242 = vmatmul.mubr.f32.gmra.mrb[0].mxu0 %v46
    %v243 = vpop.f32.mrb[0].mxu0
    %v244 = vadd.f32 %v120, %v243
    %v245 = vpop.f32.mrb[0].mxu0
    %246 = vmatprep.mubr.f32.mxu0 0.0
    %247 = vmatmul.mubr.f32.gmra.mrb[0].mxu0 %v47
    %v248 = vpop.f32.mrb[0].mxu0
    %v249 = vadd.f32 %v120, %v248
    %v250 = vpop.f32.mrb[0].mxu0
    %251 = vmatprep.mubr.f32.mxu0 0.0
    %252 = vmatmul.mubr.f32.gmra.mrb[0].mxu0 %v48
    %v253 = vpop.f32.mrb[0].mxu0
    %v254 = vadd.f32 %v120, %v253
    %v255 = vpop.f32.mrb[0].mxu0
    %256 = vmatprep.mubr.f32.mxu0 0.0
    %257 = vmatmul.mubr.f32.gmra.mrb[0].mxu0 %v49
    %v258 = vpop.f32.mrb[0].mxu0
    %v259 = vadd.f32 %v120, %v258
    %v260 = vpop.f32.mrb[0].mxu0
    %261 = vmatprep.mubr.f32.mxu0 0.0
    %262 = vmatmul.mubr.f32.gmra.mrb[0].mxu0 %v50
    %v263 = vpop.f32.mrb[0].mxu0
    %v264 = vadd.f32 %v120, %v263
    %v265 = vpop.f32.mrb[0].mxu0
    %266 = vmatprep.mubr.f32.mxu0 0.0
    %267 = vmatmul.mubr.f32.gmra.mrb[0].mxu0 %v51
    %v268 = vpop.f32.mrb[0].mxu0
    %v269 = vadd.f32 %v120, %v268
    %v270 = vpop.f32.mrb[0].mxu0
    %271 = vmatprep.mubr.f32.mxu0 0.0
    %272 = vmatmul.mubr.f32.gmra.mrb[0].mxu0 %v52
    %v273 = vpop.f32.mrb[0].mxu0
    %v274 = vadd.f32 %v120, %v273
    %v275 = vpop.f32.mrb[0].mxu0
    %276 = vmatprep.mubr.f32.mxu0 0.0
    %277 = vmatmul.mubr.f32.gmra.mrb[0].mxu0 %v53
    %v278 = vpop.f32.mrb[0].mxu0
    %v279 = vadd.f32 %v120, %v278
    %v280 = vpop.f32.mrb[0].mxu0
    %281 = vmatprep.mubr.f32.mxu0 0.0
    %282 = vmatmul.mubr.f32.gmra.mrb[0].mxu0 %v54
    %v283 = vpop.f32.mrb[0].mxu0
    %v284 = vadd.f32 %v120, %v283
    %v285 = vpop.f32.mrb[0].mxu0
    %286 = vmatprep.mubr.f32.mxu0 0.0
    %287 = vmatmul.mubr.f32.gmra.mrb[0].mxu0 %v55
    %v288 = vpop.f32.mrb[0].mxu0
    %v289 = vadd.f32 %v120, %v288
    %v290 = vpop.f32.mrb[0].mxu0
    %291 = vmatprep.mubr.f32.mxu0 0.0
    %292 = vmatmul.mubr.f32.gmra.mrb[0].mxu0 %v56
    %v293 = vpop.f32.mrb[0].mxu0
    %v294 = vadd.f32 %v120, %v293
    %v295 = vpop.f32.mrb[0].mxu0
    %296 = vmatprep.mubr.f32.mxu0 0.0
    %297 = vmatmul.mubr.f32.gmra.mrb[0].mxu0 %v57
    %v298 = vpop.f32.mrb[0].mxu0
    %v299 = vadd.f32 %v120, %v298
    %v300 = vpop.f32.mrb[0].mxu0
    %301 = vmatprep.mubr.f32.mxu0 0.0
    %302 = vmatmul.mubr.f32.gmra.mrb[0].mxu0 %v58
    %v303 = vpop.f32.mrb[0].mxu0
    %v304 = vadd.f32 %v120, %v303
    %v305 = vpop.f32.mrb[0].mxu0
    %306 = vmatprep.mubr.f32.mxu0 0.0
    %307 = vmatmul.mubr.f32.gmra.mrb[0].mxu0 %v59
    %v308 = vpop.f32.mrb[0].mxu0
    %v309 = vadd.f32 %v120, %v308
    %v310 = vpop.f32.mrb[0].mxu0
    %311 = vmatprep.mubr.f32.mxu0 0.0
    %312 = vmatmul.mubr.f32.gmra.mrb[0].mxu0 %v60
    %v313 = vpop.f32.mrb[0].mxu0
    %v314 = vadd.f32 %v120, %v313
    %v315 = vpop.f32.mrb[0].mxu0
    %316 = vmatprep.mubr.f32.mxu0 0.0
    %317 = vmatmul.mubr.f32.gmra.mrb[0].mxu0 %v61
    %v318 = vpop.f32.mrb[0].mxu0
    %v319 = vadd.f32 %v120, %v318
    %v320 = vpop.f32.mrb[0].mxu0
    %321 = vmatprep.mubr.f32.mxu0 0.0
    %322 = vmatmul.mubr.f32.gmra.mrb[0].mxu0 %v62
    %v323 = vpop.f32.mrb[0].mxu0
    %v324 = vadd.f32 %v120, %v323
    %v325 = vpop.f32.mrb[0].mxu0
    %326 = vmatprep.mubr.f32.mxu0 0.0
    %327 = vmatmul.mubr.f32.gmra.mrb[0].mxu0 %v63
    %v328 = vpop.f32.mrb[0].mxu0
    %v329 = vadd.f32 %v120, %v328
    %v330 = vpop.f32.mrb[0].mxu0
    %331 = vmatprep.mubr.f32.mxu0 0.0
    %332 = vmatmul.mubr.f32.gmra.mrb[0].mxu0 %v64
    %v333 = vpop.f32.mrb[0].mxu0
    %v334 = vadd.f32 %v120, %v333
    %v335 = vpop.f32.mrb[0].mxu0
    %336 = vmatprep.mubr.f32.mxu0 0.0
    %337 = vmatmul.mubr.f32.gmra.mrb[0].mxu0 %v65
    %v338 = vpop.f32.mrb[0].mxu0
    %v339 = vadd.f32 %v120, %v338
    %v340 = vpop.f32.mrb[0].mxu0
    %341 = vmatprep.mubr.f32.mxu0 0.0
    %342 = vmatmul.mubr.f32.gmra.mrb[0].mxu0 %v66
    %v343 = vpop.f32.mrb[0].mxu0
    %v344 = vadd.f32 %v120, %v343
    %v345 = vpop.f32.mrb[0].mxu0
    %346 = vmatprep.mubr.f32.mxu0 0.0
    %347 = vmatmul.mubr.f32.gmra.mrb[0].mxu0 %v67
    %v348 = vpop.f32.mrb[0].mxu0
    %v349 = vadd.f32 %v120, %v348
    %v350 = vpop.f32.mrb[0].mxu0
    %351 = vmatprep.mubr.f32.mxu0 0.0
    %352 = vmatmul.mubr.f32.gmra.mrb[0].mxu0 %v68
    %v353 = vpop.f32.mrb[0].mxu0
    %v354 = vadd.f32 %v120, %v353
    %v355 = vpop.f32.mrb[0].mxu0
    %356 = vmatprep.mubr.f32.mxu0 0.0
    %357 = vmatmul.mubr.f32.gmra.mrb[0].mxu0 %v69
    %v358 = vpop.f32.mrb[0].mxu0
    %v359 = vadd.f32 %v120, %v358
    %v360 = vpop.f32.mrb[0].mxu0
    %361 = vmatprep.mubr.f32.mxu0 0.0
    %362 = vmatmul.mubr.f32.gmra.mrb[0].mxu0 %v70
    %v363 = vpop.f32.mrb[0].mxu0
    %v364 = vadd.f32 %v120, %v363
    %v365 = vpop.f32.mrb[0].mxu0
    %366 = vmatprep.mubr.f32.mxu0 0.0
    %367 = vmatmul.mubr.f32.gmra.mrb[0].mxu0 %v71
    %v368 = vpop.f32.mrb[0].mxu0
    %v369 = vadd.f32 %v120, %v368
    %v370 = vpop.f32.mrb[0].mxu0
    %371 = vmatprep.mubr.f32.mxu0 0.0
    %372 = vmatmul.mubr.f32.gmra.mrb[0].mxu0 %v72
    %v373 = vpop.f32.mrb[0].mxu0
    %v374 = vadd.f32 %v120, %v373
    %v375 = vpop.f32.mrb[0].mxu0
    %376 = vmatprep.mubr.f32.mxu0 0.0
    %377 = vmatmul.mubr.f32.gmra.mrb[0].mxu0 %v73
    %v378 = vpop.f32.mrb[0].mxu0
    %v379 = vadd.f32 %v120, %v378
    %v380 = vpop.f32.mrb[0].mxu0
    %381 = vmatprep.mubr.f32.mxu0 0.0
    %382 = vmatmul.mubr.f32.gmra.mrb[0].mxu0 %v74
    %v383 = vpop.f32.mrb[0].mxu0
    %v384 = vadd.f32 %v120, %v383
    %v385 = vpop.f32.mrb[0].mxu0
    %386 = vmatprep.mubr.f32.mxu0 0.0
    %387 = vmatmul.mubr.f32.gmra.mrb[0].mxu0 %v75
    %v388 = vpop.f32.mrb[0].mxu0
    %v389 = vadd.f32 %v120, %v388
    %v390 = vpop.f32.mrb[0].mxu0
    %391 = vmatprep.mubr.f32.mxu0 0.0
    %392 = vmatmul.mubr.f32.gmra.mrb[0].mxu0 %v76
    %v393 = vpop.f32.mrb[0].mxu0
    %v394 = vadd.f32 %v120, %v393
    %v395 = vpop.f32.mrb[0].mxu0
    %396 = vmatprep.mubr.f32.mxu0 0.0
    %397 = vmatmul.mubr.f32.gmra.mrb[0].mxu0 %v77
    %v398 = vpop.f32.mrb[0].mxu0
    %v399 = vadd.f32 %v120, %v398
    %v400 = vpop.f32.mrb[0].mxu0
    %401 = vmatprep.mubr.f32.mxu0 0.0
    %402 = vmatmul.mubr.f32.gmra.mrb[0].mxu0 %v78
    %v403 = vpop.f32.mrb[0].mxu0
    %v404 = vadd.f32 %v120, %v403
    %v405 = vpop.f32.mrb[0].mxu0
    %406 = vmatprep.mubr.f32.mxu0 0.0
    %407 = vmatmul.mubr.f32.gmra.mrb[0].mxu0 %v79
    %v408 = vpop.f32.mrb[0].mxu0
    %v409 = vadd.f32 %v120, %v408
    %v410 = vpop.f32.mrb[0].mxu0
    %411 = vmatprep.mubr.f32.mxu0 0.0
    %412 = vmatmul.mubr.f32.gmra.mrb[0].mxu0 %v80
    %v413 = vpop.f32.mrb[0].mxu0
    %v414 = vadd.f32 %v120, %v413
    %v415 = vpop.f32.mrb[0].mxu0
    %416 = vmatprep.mubr.f32.mxu0 0.0
    %417 = vmatmul.mubr.f32.gmra.mrb[0].mxu0 %v81
    %v418 = vpop.f32.mrb[0].mxu0
    %v419 = vadd.f32 %v120, %v418
    %v420 = vpop.f32.mrb[0].mxu0
    %421 = vmatprep.mubr.f32.mxu0 0.0
    %422 = vmatmul.mubr.f32.gmra.mrb[0].mxu0 %v82
    %v423 = vpop.f32.mrb[0].mxu0
    %v424 = vadd.f32 %v120, %v423
    %v425 = vpop.f32.mrb[0].mxu0
    %426 = vmatprep.mubr.f32.mxu0 0.0
    %427 = vmatmul.mubr.f32.gmra.mrb[0].mxu0 %v83
    %v428 = vpop.f32.mrb[0].mxu0
    %v429 = vadd.f32 %v120, %v428
    %v430 = vpop.f32.mrb[0].mxu0
    %431 = vmatprep.mubr.f32.mxu0 0.0
    %432 = vmatmul.mubr.f32.gmra.mrb[0].mxu0 %v84
    %v433 = vpop.f32.mrb[0].mxu0
    %v434 = vadd.f32 %v120, %v433
    %v435 = vpop.f32.mrb[0].mxu0
    %436 = vmatprep.mubr.f32.mxu0 0.0
    %437 = vmatmul.mubr.f32.gmra.mrb[0].mxu0 %v85
    %v438 = vpop.f32.mrb[0].mxu0
    %v439 = vadd.f32 %v120, %v438
    %v440 = vpop.f32.mrb[0].mxu0
    %441 = vmatprep.mubr.f32.mxu0 0.0
    %442 = vmatmul.mubr.f32.gmra.mrb[0].mxu0 %v86
    %v443 = vpop.f32.mrb[0].mxu0
    %v444 = vadd.f32 %v120, %v443
    %v445 = vpop.f32.mrb[0].mxu0
    %446 = vmatprep.mubr.f32.mxu0 0.0
    %447 = vmatmul.mubr.f32.gmra.mrb[0].mxu0 %v87
    %v448 = vpop.f32.mrb[0].mxu0
    %v449 = vadd.f32 %v120, %v448
    %v450 = vpop.f32.mrb[0].mxu0
    %451 = vmatprep.mubr.f32.mxu0 0.0
    %452 = vmatmul.mubr.f32.gmra.mrb[0].mxu0 %v88
    %v453 = vpop.f32.mrb[0].mxu0
    %v454 = vadd.f32 %v120, %v453
    %v455 = vpop.f32.mrb[0].mxu0
    %456 = vmatprep.mubr.f32.mxu0 0.0
    %457 = vmatmul.mubr.f32.gmra.mrb[0].mxu0 %v89
    %v458 = vpop.f32.mrb[0].mxu0
    %v459 = vadd.f32 %v120, %v458
    %v460 = vpop.f32.mrb[0].mxu0
    %461 = vmatprep.mubr.f32.mxu0 0.0
    %462 = vmatmul.mubr.f32.gmra.mrb[0].mxu0 %v90
    %v463 = vpop.f32.mrb[0].mxu0
    %v464 = vadd.f32 %v120, %v463
    %v465 = vpop.f32.mrb[0].mxu0
    %466 = vmatprep.mubr.f32.mxu0 0.0
    %467 = vmatmul.mubr.f32.gmra.mrb[0].mxu0 %v91
    %v468 = vpop.f32.mrb[0].mxu0
    %v469 = vadd.f32 %v120, %v468
    %v470 = vpop.f32.mrb[0].mxu0
    %471 = vmatprep.mubr.f32.mxu0 0.0
    %472 = vmatmul.mubr.f32.gmra.mrb[0].mxu0 %v92
    %v473 = vpop.f32.mrb[0].mxu0
    %v474 = vadd.f32 %v120, %v473
    %v475 = vpop.f32.mrb[0].mxu0
    %476 = vmatprep.mubr.f32.mxu0 0.0
    %477 = vmatmul.mubr.f32.gmra.mrb[0].mxu0 %v93
    %v478 = vpop.f32.mrb[0].mxu0
    %v479 = vadd.f32 %v120, %v478
    %v480 = vpop.f32.mrb[0].mxu0
    %481 = vmatprep.mubr.f32.mxu0 0.0
    %482 = vmatmul.mubr.f32.gmra.mrb[0].mxu0 %v94
    %v483 = vpop.f32.mrb[0].mxu0
    %v484 = vadd.f32 %v120, %v483
    %v485 = vpop.f32.mrb[0].mxu0
    %486 = vmatprep.mubr.f32.mxu0 0.0
    %487 = vmatmul.mubr.f32.gmra.mrb[0].mxu0 %v95
    %v488 = vpop.f32.mrb[0].mxu0
    %v489 = vadd.f32 %v120, %v488
    %v490 = vpop.f32.mrb[0].mxu0
    %491 = vmatprep.mubr.f32.mxu0 0.0
    %492 = vmatmul.mubr.f32.gmra.mrb[0].mxu0 %v96
    %v493 = vpop.f32.mrb[0].mxu0
    %v494 = vadd.f32 %v120, %v493
    %v495 = vpop.f32.mrb[0].mxu0
    %496 = vmatprep.mubr.f32.mxu0 0.0
    %497 = vmatmul.mubr.f32.gmra.mrb[0].mxu0 %v97
    %v498 = vpop.f32.mrb[0].mxu0
    %v499 = vadd.f32 %v120, %v498
    %v500 = vpop.f32.mrb[0].mxu0
    %501 = vmatprep.mubr.f32.mxu0 0.0
    %502 = vmatmul.mubr.f32.gmra.mrb[0].mxu0 %v98
    %v503 = vpop.f32.mrb[0].mxu0
    %v504 = vadd.f32 %v120, %v503
    %v505 = vpop.f32.mrb[0].mxu0
    %506 = vdwg.mxu0
    %v507 = vmax.f32 %v189, 0.0
    %v508 = vmax.f32 %v194, 0.0
    %v509 = vmax.f32 %v199, 0.0
    %v510 = vmax.f32 %v204, 0.0
    %v511 = vmax.f32 %v209, 0.0
    %v512 = vmax.f32 %v214, 0.0
    %v513 = vmax.f32 %v219, 0.0
    %v514 = vmax.f32 %v224, 0.0
    %v515 = vmax.f32 %v229, 0.0
    %v516 = vmax.f32 %v234, 0.0
    %v517 = vmax.f32 %v239, 0.0
    %v518 = vmax.f32 %v244, 0.0
    %v519 = vmax.f32 %v249, 0.0
    %v520 = vmax.f32 %v254, 0.0
    %v521 = vmax.f32 %v259, 0.0
    %v522 = vmax.f32 %v264, 0.0
    %v523 = vmax.f32 %v269, 0.0
    %v524 = vmax.f32 %v274, 0.0
    %v525 = vmax.f32 %v279, 0.0
    %v526 = vmax.f32 %v284, 0.0
    %v527 = vmax.f32 %v289, 0.0
    %v528 = vmax.f32 %v294, 0.0
    %v529 = vmax.f32 %v299, 0.0
    %v530 = vmax.f32 %v304, 0.0
    %v531 = vmax.f32 %v309, 0.0
    %v532 = vmax.f32 %v314, 0.0
    %v533 = vmax.f32 %v319, 0.0
    %v534 = vmax.f32 %v324, 0.0
    %v535 = vmax.f32 %v329, 0.0
    %v536 = vmax.f32 %v334, 0.0
    %v537 = vmax.f32 %v339, 0.0
    %v538 = vmax.f32 %v344, 0.0
    %v539 = vmax.f32 %v349, 0.0
    %v540 = vmax.f32 %v354, 0.0
    %v541 = vmax.f32 %v359, 0.0
    %v542 = vmax.f32 %v364, 0.0
    %v543 = vmax.f32 %v369, 0.0
    %v544 = vmax.f32 %v374, 0.0
    %v545 = vmax.f32 %v379, 0.0
    %v546 = vmax.f32 %v384, 0.0
    %v547 = vmax.f32 %v389, 0.0
    %v548 = vmax.f32 %v394, 0.0
    %v549 = vmax.f32 %v399, 0.0
    %v550 = vmax.f32 %v404, 0.0
    %v551 = vmax.f32 %v409, 0.0
    %v552 = vmax.f32 %v414, 0.0
    %v553 = vmax.f32 %v419, 0.0
    %v554 = vmax.f32 %v424, 0.0
    %v555 = vmax.f32 %v429, 0.0
    %v556 = vmax.f32 %v434, 0.0
    %v557 = vmax.f32 %v439, 0.0
    %v558 = vmax.f32 %v444, 0.0
    %v559 = vmax.f32 %v449, 0.0
    %v560 = vmax.f32 %v454, 0.0
    %v561 = vmax.f32 %v459, 0.0
    %v562 = vmax.f32 %v464, 0.0
    %v563 = vmax.f32 %v469, 0.0
    %v564 = vmax.f32 %v474, 0.0
    %v565 = vmax.f32 %v479, 0.0
    %v566 = vmax.f32 %v484, 0.0
    %v567 = vmax.f32 %v489, 0.0
    %v568 = vmax.f32 %v494, 0.0
    %v569 = vmax.f32 %v499, 0.0
    %v570 = vmax.f32 %v504, 0.0
    %v571 = vld [vmem:[%s3] sm:$0xff]
    %v572 = vld [vmem:[%s3 + $0x8] sm:$0xff]
    %v573 = vld [vmem:[%s3 + $0x10] sm:$0xff]
    %v574 = vld [vmem:[%s3 + $0x18] sm:$0xff]
    %v575 = vld [vmem:[%s4] sm:$0x1]
    %v577 = vlaneseq
    %v578 = vshrl.u32 %v577, 7
    %v579 = vsub.s32 0, %v578
    %v580 = vrot.slane %v575, %v579
    %vm582 = vcmask 261120
    %v584 = vsel %vm582, %v507, 0
    %v587 = vsel %vm582, %v508, 0
    %v590 = vsel %vm582, %v509, 0
    %v593 = vsel %vm582, %v510, 0
    %v596 = vsel %vm582, %v511, 0
    %v599 = vsel %vm582, %v512, 0
    %v602 = vsel %vm582, %v513, 0
    %v605 = vsel %vm582, %v514, 0
    %v608 = vsel %vm582, %v515, 0
    %v611 = vsel %vm582, %v516, 0
    %v614 = vsel %vm582, %v517, 0
    %v617 = vsel %vm582, %v518, 0
    %v620 = vsel %vm582, %v519, 0
    %v623 = vsel %vm582, %v520, 0
    %v626 = vsel %vm582, %v521, 0
    %v629 = vsel %vm582, %v522, 0
    %v632 = vsel %vm582, %v523, 0
    %v635 = vsel %vm582, %v524, 0
    %v638 = vsel %vm582, %v525, 0
    %v641 = vsel %vm582, %v526, 0
    %v644 = vsel %vm582, %v527, 0
    %v647 = vsel %vm582, %v528, 0
    %v650 = vsel %vm582, %v529, 0
    %v653 = vsel %vm582, %v530, 0
    %v656 = vsel %vm582, %v531, 0
    %v659 = vsel %vm582, %v532, 0
    %v662 = vsel %vm582, %v533, 0
    %v665 = vsel %vm582, %v534, 0
    %v668 = vsel %vm582, %v535, 0
    %v671 = vsel %vm582, %v536, 0
    %v674 = vsel %vm582, %v537, 0
    %v677 = vsel %vm582, %v538, 0
    %v680 = vsel %vm582, %v539, 0
    %v683 = vsel %vm582, %v540, 0
    %v686 = vsel %vm582, %v541, 0
    %v689 = vsel %vm582, %v542, 0
    %v692 = vsel %vm582, %v543, 0
    %v695 = vsel %vm582, %v544, 0
    %v698 = vsel %vm582, %v545, 0
    %v701 = vsel %vm582, %v546, 0
    %v704 = vsel %vm582, %v547, 0
    %v707 = vsel %vm582, %v548, 0
    %v710 = vsel %vm582, %v549, 0
    %v713 = vsel %vm582, %v550, 0
    %v716 = vsel %vm582, %v551, 0
    %v719 = vsel %vm582, %v552, 0
    %v722 = vsel %vm582, %v553, 0
    %v725 = vsel %vm582, %v554, 0
    %v728 = vsel %vm582, %v555, 0
    %v731 = vsel %vm582, %v556, 0
    %v734 = vsel %vm582, %v557, 0
    %v737 = vsel %vm582, %v558, 0
    %v740 = vsel %vm582, %v559, 0
    %v743 = vsel %vm582, %v560, 0
    %v746 = vsel %vm582, %v561, 0
    %v749 = vsel %vm582, %v562, 0
    %v752 = vsel %vm582, %v563, 0
    %v755 = vsel %vm582, %v564, 0
    %v758 = vsel %vm582, %v565, 0
    %v761 = vsel %vm582, %v566, 0
    %v764 = vsel %vm582, %v567, 0
    %v767 = vsel %vm582, %v568, 0
    %v770 = vsel %vm582, %v569, 0
    %v773 = vsel %vm582, %v570, 0
    %775 = vmatprep.subr.mxu0 0.0
    %776 = vmatpush1.msra.mxu0 %v571
    %777 = vmatprep.subr.mxu0 0.0
    %778 = vmatpush1.msra.mxu0 %v572
    %779 = vmatprep.subr.mxu0 0.0
    %780 = vmatpush1.msra.mxu0 %v573
    %781 = vmatprep.subr.mxu0 0.0
    %782 = vmatpush1.msra.mxu0 %v574
    %783 = vmatprep.subr.mxu0 0.0
    %784 = vmatpush1.msra.mxu0 0.0
    %785 = vmatprep.subr.mxu0 0.0
    %786 = vmatpush1.msra.mxu0 0.0
    %787 = vmatprep.subr.mxu0 0.0
    %788 = vmatpush1.msra.mxu0 0.0
    %789 = vmatprep.subr.mxu0 0.0
    %790 = vmatpush1.msra.mxu0 0.0
    %791 = vmatprep.subr.mxu0 0.0
    %792 = vmatpush1.msra.mxu0 0.0
    %793 = vmatprep.subr.mxu0 0.0
    %794 = vmatpush1.msra.mxu0 0.0
    %795 = vmatprep.subr.mxu0 0.0
    %796 = vmatpush1.msra.mxu0 0.0
    %797 = vmatprep.subr.mxu0 0.0
    %798 = vmatpush1.msra.mxu0 0.0
    %799 = vmatprep.subr.mxu0 0.0
    %800 = vmatpush1.msra.mxu0 0.0
    %801 = vmatprep.subr.mxu0 0.0
    %802 = vmatpush1.msra.mxu0 0.0
    %803 = vmatprep.subr.mxu0 0.0
    %804 = vmatpush1.msra.mxu0 0.0
    %805 = vmatprep.subr.mxu0 0.0
    %806 = vmatpush1.msra.mxu0 0.0
    %807 = vmatprep.subr.mxu0 0.0
    %808 = vmatpush1.msra.mxu0 0.0
    %809 = vmatprep.subr.mxu0 0.0
    %810 = vmatpush1.msra.mxu0 0.0
    %811 = vmatprep.subr.mxu0 0.0
    %812 = vmatpush1.msra.mxu0 0.0
    %813 = vmatprep.subr.mxu0 0.0
    %814 = vmatpush1.msra.mxu0 0.0
    %815 = vmatprep.subr.mxu0 0.0
    %816 = vmatpush1.msra.mxu0 0.0
    %817 = vmatprep.subr.mxu0 0.0
    %818 = vmatpush1.msra.mxu0 0.0
    %819 = vmatprep.subr.mxu0 0.0
    %820 = vmatpush1.msra.mxu0 0.0
    %821 = vmatprep.subr.mxu0 0.0
    %822 = vmatpush1.msra.mxu0 0.0
    %823 = vmatprep.subr.mxu0 0.0
    %824 = vmatpush1.msra.mxu0 0.0
    %825 = vmatprep.subr.mxu0 0.0
    %826 = vmatpush1.msra.mxu0 0.0
    %827 = vmatprep.subr.mxu0 0.0
    %828 = vmatpush1.msra.mxu0 0.0
    %829 = vmatprep.subr.mxu0 0.0
    %830 = vmatpush1.msra.mxu0 0.0
    %831 = vmatprep.subr.mxu0 0.0
    %832 = vmatpush1.msra.mxu0 0.0
    %833 = vmatprep.subr.mxu0 0.0
    %834 = vmatpush1.msra.mxu0 0.0
    %835 = vmatprep.subr.mxu0 0.0
    %836 = vmatpush1.msra.mxu0 0.0
    %837 = vmatprep.subr.mxu0 0.0
    %838 = vmatpush1.msra.mxu0 0.0
    %839 = vmatprep.mubr.f32.mxu0 0.0
    %840 = vmatmul.mubr.f32.gmra.mrb[0].mxu0 %v584
    %v841 = vpop.f32.mrb[0].mxu0
    %v842 = vadd.f32 %v580, %v841
    %v843 = vpop.f32.mrb[0].mxu0
    %844 = vmatprep.mubr.f32.mxu0 0.0
    %845 = vmatmul.mubr.f32.gmra.mrb[0].mxu0 %v587
    %v846 = vpop.f32.mrb[0].mxu0
    %v847 = vadd.f32 %v580, %v846
    %v848 = vpop.f32.mrb[0].mxu0
    %849 = vmatprep.mubr.f32.mxu0 0.0
    %850 = vmatmul.mubr.f32.gmra.mrb[0].mxu0 %v590
    %v851 = vpop.f32.mrb[0].mxu0
    %v852 = vadd.f32 %v580, %v851
    %v853 = vpop.f32.mrb[0].mxu0
    %854 = vmatprep.mubr.f32.mxu0 0.0
    %855 = vmatmul.mubr.f32.gmra.mrb[0].mxu0 %v593
    %v856 = vpop.f32.mrb[0].mxu0
    %v857 = vadd.f32 %v580, %v856
    %v858 = vpop.f32.mrb[0].mxu0
    %859 = vmatprep.mubr.f32.mxu0 0.0
    %860 = vmatmul.mubr.f32.gmra.mrb[0].mxu0 %v596
    %v861 = vpop.f32.mrb[0].mxu0
    %v862 = vadd.f32 %v580, %v861
    %v863 = vpop.f32.mrb[0].mxu0
    %864 = vmatprep.mubr.f32.mxu0 0.0
    %865 = vmatmul.mubr.f32.gmra.mrb[0].mxu0 %v599
    %v866 = vpop.f32.mrb[0].mxu0
    %v867 = vadd.f32 %v580, %v866
    %v868 = vpop.f32.mrb[0].mxu0
    %869 = vmatprep.mubr.f32.mxu0 0.0
    %870 = vmatmul.mubr.f32.gmra.mrb[0].mxu0 %v602
    %v871 = vpop.f32.mrb[0].mxu0
    %v872 = vadd.f32 %v580, %v871
    %v873 = vpop.f32.mrb[0].mxu0
    %874 = vmatprep.mubr.f32.mxu0 0.0
    %875 = vmatmul.mubr.f32.gmra.mrb[0].mxu0 %v605
    %v876 = vpop.f32.mrb[0].mxu0
    %v877 = vadd.f32 %v580, %v876
    %v878 = vpop.f32.mrb[0].mxu0
    %879 = vmatprep.mubr.f32.mxu0 0.0
    %880 = vmatmul.mubr.f32.gmra.mrb[0].mxu0 %v608
    %v881 = vpop.f32.mrb[0].mxu0
    %v882 = vadd.f32 %v580, %v881
    %v883 = vpop.f32.mrb[0].mxu0
    %884 = vmatprep.mubr.f32.mxu0 0.0
    %885 = vmatmul.mubr.f32.gmra.mrb[0].mxu0 %v611
    %v886 = vpop.f32.mrb[0].mxu0
    %v887 = vadd.f32 %v580, %v886
    %v888 = vpop.f32.mrb[0].mxu0
    %889 = vmatprep.mubr.f32.mxu0 0.0
    %890 = vmatmul.mubr.f32.gmra.mrb[0].mxu0 %v614
    %v891 = vpop.f32.mrb[0].mxu0
    %v892 = vadd.f32 %v580, %v891
    %v893 = vpop.f32.mrb[0].mxu0
    %894 = vmatprep.mubr.f32.mxu0 0.0
    %895 = vmatmul.mubr.f32.gmra.mrb[0].mxu0 %v617
    %v896 = vpop.f32.mrb[0].mxu0
    %v897 = vadd.f32 %v580, %v896
    %v898 = vpop.f32.mrb[0].mxu0
    %899 = vmatprep.mubr.f32.mxu0 0.0
    %900 = vmatmul.mubr.f32.gmra.mrb[0].mxu0 %v620
    %v901 = vpop.f32.mrb[0].mxu0
    %v902 = vadd.f32 %v580, %v901
    %v903 = vpop.f32.mrb[0].mxu0
    %904 = vmatprep.mubr.f32.mxu0 0.0
    %905 = vmatmul.mubr.f32.gmra.mrb[0].mxu0 %v623
    %v906 = vpop.f32.mrb[0].mxu0
    %v907 = vadd.f32 %v580, %v906
    %v908 = vpop.f32.mrb[0].mxu0
    %909 = vmatprep.mubr.f32.mxu0 0.0
    %910 = vmatmul.mubr.f32.gmra.mrb[0].mxu0 %v626
    %v911 = vpop.f32.mrb[0].mxu0
    %v912 = vadd.f32 %v580, %v911
    %v913 = vpop.f32.mrb[0].mxu0
    %914 = vmatprep.mubr.f32.mxu0 0.0
    %915 = vmatmul.mubr.f32.gmra.mrb[0].mxu0 %v629
    %v916 = vpop.f32.mrb[0].mxu0
    %v917 = vadd.f32 %v580, %v916
    %v918 = vpop.f32.mrb[0].mxu0
    %919 = vmatprep.mubr.f32.mxu0 0.0
    %920 = vmatmul.mubr.f32.gmra.mrb[0].mxu0 %v632
    %v921 = vpop.f32.mrb[0].mxu0
    %v922 = vadd.f32 %v580, %v921
    %v923 = vpop.f32.mrb[0].mxu0
    %924 = vmatprep.mubr.f32.mxu0 0.0
    %925 = vmatmul.mubr.f32.gmra.mrb[0].mxu0 %v635
    %v926 = vpop.f32.mrb[0].mxu0
    %v927 = vadd.f32 %v580, %v926
    %v928 = vpop.f32.mrb[0].mxu0
    %929 = vmatprep.mubr.f32.mxu0 0.0
    %930 = vmatmul.mubr.f32.gmra.mrb[0].mxu0 %v638
    %v931 = vpop.f32.mrb[0].mxu0
    %v932 = vadd.f32 %v580, %v931
    %v933 = vpop.f32.mrb[0].mxu0
    %934 = vmatprep.mubr.f32.mxu0 0.0
    %935 = vmatmul.mubr.f32.gmra.mrb[0].mxu0 %v641
    %v936 = vpop.f32.mrb[0].mxu0
    %v937 = vadd.f32 %v580, %v936
    %v938 = vpop.f32.mrb[0].mxu0
    %939 = vmatprep.mubr.f32.mxu0 0.0
    %940 = vmatmul.mubr.f32.gmra.mrb[0].mxu0 %v644
    %v941 = vpop.f32.mrb[0].mxu0
    %v942 = vadd.f32 %v580, %v941
    %v943 = vpop.f32.mrb[0].mxu0
    %944 = vmatprep.mubr.f32.mxu0 0.0
    %945 = vmatmul.mubr.f32.gmra.mrb[0].mxu0 %v647
    %v946 = vpop.f32.mrb[0].mxu0
    %v947 = vadd.f32 %v580, %v946
    %v948 = vpop.f32.mrb[0].mxu0
    %949 = vmatprep.mubr.f32.mxu0 0.0
    %950 = vmatmul.mubr.f32.gmra.mrb[0].mxu0 %v650
    %v951 = vpop.f32.mrb[0].mxu0
    %v952 = vadd.f32 %v580, %v951
    %v953 = vpop.f32.mrb[0].mxu0
    %954 = vmatprep.mubr.f32.mxu0 0.0
    %955 = vmatmul.mubr.f32.gmra.mrb[0].mxu0 %v653
    %v956 = vpop.f32.mrb[0].mxu0
    %v957 = vadd.f32 %v580, %v956
    %v958 = vpop.f32.mrb[0].mxu0
    %959 = vmatprep.mubr.f32.mxu0 0.0
    %960 = vmatmul.mubr.f32.gmra.mrb[0].mxu0 %v656
    %v961 = vpop.f32.mrb[0].mxu0
    %v962 = vadd.f32 %v580, %v961
    %v963 = vpop.f32.mrb[0].mxu0
    %964 = vmatprep.mubr.f32.mxu0 0.0
    %965 = vmatmul.mubr.f32.gmra.mrb[0].mxu0 %v659
    %v966 = vpop.f32.mrb[0].mxu0
    %v967 = vadd.f32 %v580, %v966
    %v968 = vpop.f32.mrb[0].mxu0
    %969 = vmatprep.mubr.f32.mxu0 0.0
    %970 = vmatmul.mubr.f32.gmra.mrb[0].mxu0 %v662
    %v971 = vpop.f32.mrb[0].mxu0
    %v972 = vadd.f32 %v580, %v971
    %v973 = vpop.f32.mrb[0].mxu0
    %974 = vmatprep.mubr.f32.mxu0 0.0
    %975 = vmatmul.mubr.f32.gmra.mrb[0].mxu0 %v665
    %v976 = vpop.f32.mrb[0].mxu0
    %v977 = vadd.f32 %v580, %v976
    %v978 = vpop.f32.mrb[0].mxu0
    %979 = vmatprep.mubr.f32.mxu0 0.0
    %980 = vmatmul.mubr.f32.gmra.mrb[0].mxu0 %v668
    %v981 = vpop.f32.mrb[0].mxu0
    %v982 = vadd.f32 %v580, %v981
    %v983 = vpop.f32.mrb[0].mxu0
    %984 = vmatprep.mubr.f32.mxu0 0.0
    %985 = vmatmul.mubr.f32.gmra.mrb[0].mxu0 %v671
    %v986 = vpop.f32.mrb[0].mxu0
    %v987 = vadd.f32 %v580, %v986
    %v988 = vpop.f32.mrb[0].mxu0
    %989 = vmatprep.mubr.f32.mxu0 0.0
    %990 = vmatmul.mubr.f32.gmra.mrb[0].mxu0 %v674
    %v991 = vpop.f32.mrb[0].mxu0
    %v992 = vadd.f32 %v580, %v991
    %v993 = vpop.f32.mrb[0].mxu0
    %994 = vmatprep.mubr.f32.mxu0 0.0
    %995 = vmatmul.mubr.f32.gmra.mrb[0].mxu0 %v677
    %v996 = vpop.f32.mrb[0].mxu0
    %v997 = vadd.f32 %v580, %v996
    %v998 = vpop.f32.mrb[0].mxu0
    %999 = vmatprep.mubr.f32.mxu0 0.0
    %1000 = vmatmul.mubr.f32.gmra.mrb[0].mxu0 %v680
    %v1001 = vpop.f32.mrb[0].mxu0
    %v1002 = vadd.f32 %v580, %v1001
    %v1003 = vpop.f32.mrb[0].mxu0
    %1004 = vmatprep.mubr.f32.mxu0 0.0
    %1005 = vmatmul.mubr.f32.gmra.mrb[0].mxu0 %v683
    %v1006 = vpop.f32.mrb[0].mxu0
    %v1007 = vadd.f32 %v580, %v1006
    %v1008 = vpop.f32.mrb[0].mxu0
    %1009 = vmatprep.mubr.f32.mxu0 0.0
    %1010 = vmatmul.mubr.f32.gmra.mrb[0].mxu0 %v686
    %v1011 = vpop.f32.mrb[0].mxu0
    %v1012 = vadd.f32 %v580, %v1011
    %v1013 = vpop.f32.mrb[0].mxu0
    %1014 = vmatprep.mubr.f32.mxu0 0.0
    %1015 = vmatmul.mubr.f32.gmra.mrb[0].mxu0 %v689
    %v1016 = vpop.f32.mrb[0].mxu0
    %v1017 = vadd.f32 %v580, %v1016
    %v1018 = vpop.f32.mrb[0].mxu0
    %1019 = vmatprep.mubr.f32.mxu0 0.0
    %1020 = vmatmul.mubr.f32.gmra.mrb[0].mxu0 %v692
    %v1021 = vpop.f32.mrb[0].mxu0
    %v1022 = vadd.f32 %v580, %v1021
    %v1023 = vpop.f32.mrb[0].mxu0
    %1024 = vmatprep.mubr.f32.mxu0 0.0
    %1025 = vmatmul.mubr.f32.gmra.mrb[0].mxu0 %v695
    %v1026 = vpop.f32.mrb[0].mxu0
    %v1027 = vadd.f32 %v580, %v1026
    %v1028 = vpop.f32.mrb[0].mxu0
    %1029 = vmatprep.mubr.f32.mxu0 0.0
    %1030 = vmatmul.mubr.f32.gmra.mrb[0].mxu0 %v698
    %v1031 = vpop.f32.mrb[0].mxu0
    %v1032 = vadd.f32 %v580, %v1031
    %v1033 = vpop.f32.mrb[0].mxu0
    %1034 = vmatprep.mubr.f32.mxu0 0.0
    %1035 = vmatmul.mubr.f32.gmra.mrb[0].mxu0 %v701
    %v1036 = vpop.f32.mrb[0].mxu0
    %v1037 = vadd.f32 %v580, %v1036
    %v1038 = vpop.f32.mrb[0].mxu0
    %1039 = vmatprep.mubr.f32.mxu0 0.0
    %1040 = vmatmul.mubr.f32.gmra.mrb[0].mxu0 %v704
    %v1041 = vpop.f32.mrb[0].mxu0
    %v1042 = vadd.f32 %v580, %v1041
    %v1043 = vpop.f32.mrb[0].mxu0
    %1044 = vmatprep.mubr.f32.mxu0 0.0
    %1045 = vmatmul.mubr.f32.gmra.mrb[0].mxu0 %v707
    %v1046 = vpop.f32.mrb[0].mxu0
    %v1047 = vadd.f32 %v580, %v1046
    %v1048 = vpop.f32.mrb[0].mxu0
    %1049 = vmatprep.mubr.f32.mxu0 0.0
    %1050 = vmatmul.mubr.f32.gmra.mrb[0].mxu0 %v710
    %v1051 = vpop.f32.mrb[0].mxu0
    %v1052 = vadd.f32 %v580, %v1051
    %v1053 = vpop.f32.mrb[0].mxu0
    %1054 = vmatprep.mubr.f32.mxu0 0.0
    %1055 = vmatmul.mubr.f32.gmra.mrb[0].mxu0 %v713
    %v1056 = vpop.f32.mrb[0].mxu0
    %v1057 = vadd.f32 %v580, %v1056
    %v1058 = vpop.f32.mrb[0].mxu0
    %1059 = vmatprep.mubr.f32.mxu0 0.0
    %1060 = vmatmul.mubr.f32.gmra.mrb[0].mxu0 %v716
    %v1061 = vpop.f32.mrb[0].mxu0
    %v1062 = vadd.f32 %v580, %v1061
    %v1063 = vpop.f32.mrb[0].mxu0
    %1064 = vmatprep.mubr.f32.mxu0 0.0
    %1065 = vmatmul.mubr.f32.gmra.mrb[0].mxu0 %v719
    %v1066 = vpop.f32.mrb[0].mxu0
    %v1067 = vadd.f32 %v580, %v1066
    %v1068 = vpop.f32.mrb[0].mxu0
    %1069 = vmatprep.mubr.f32.mxu0 0.0
    %1070 = vmatmul.mubr.f32.gmra.mrb[0].mxu0 %v722
    %v1071 = vpop.f32.mrb[0].mxu0
    %v1072 = vadd.f32 %v580, %v1071
    %v1073 = vpop.f32.mrb[0].mxu0
    %1074 = vmatprep.mubr.f32.mxu0 0.0
    %1075 = vmatmul.mubr.f32.gmra.mrb[0].mxu0 %v725
    %v1076 = vpop.f32.mrb[0].mxu0
    %v1077 = vadd.f32 %v580, %v1076
    %v1078 = vpop.f32.mrb[0].mxu0
    %1079 = vmatprep.mubr.f32.mxu0 0.0
    %1080 = vmatmul.mubr.f32.gmra.mrb[0].mxu0 %v728
    %v1081 = vpop.f32.mrb[0].mxu0
    %v1082 = vadd.f32 %v580, %v1081
    %v1083 = vpop.f32.mrb[0].mxu0
    %1084 = vmatprep.mubr.f32.mxu0 0.0
    %1085 = vmatmul.mubr.f32.gmra.mrb[0].mxu0 %v731
    %v1086 = vpop.f32.mrb[0].mxu0
    %v1087 = vadd.f32 %v580, %v1086
    %v1088 = vpop.f32.mrb[0].mxu0
    %1089 = vmatprep.mubr.f32.mxu0 0.0
    %1090 = vmatmul.mubr.f32.gmra.mrb[0].mxu0 %v734
    %v1091 = vpop.f32.mrb[0].mxu0
    %v1092 = vadd.f32 %v580, %v1091
    %v1093 = vpop.f32.mrb[0].mxu0
    %1094 = vmatprep.mubr.f32.mxu0 0.0
    %1095 = vmatmul.mubr.f32.gmra.mrb[0].mxu0 %v737
    %v1096 = vpop.f32.mrb[0].mxu0
    %v1097 = vadd.f32 %v580, %v1096
    %v1098 = vpop.f32.mrb[0].mxu0
    %1099 = vmatprep.mubr.f32.mxu0 0.0
    %1100 = vmatmul.mubr.f32.gmra.mrb[0].mxu0 %v740
    %v1101 = vpop.f32.mrb[0].mxu0
    %v1102 = vadd.f32 %v580, %v1101
    %v1103 = vpop.f32.mrb[0].mxu0
    %1104 = vmatprep.mubr.f32.mxu0 0.0
    %1105 = vmatmul.mubr.f32.gmra.mrb[0].mxu0 %v743
    %v1106 = vpop.f32.mrb[0].mxu0
    %v1107 = vadd.f32 %v580, %v1106
    %v1108 = vpop.f32.mrb[0].mxu0
    %1109 = vmatprep.mubr.f32.mxu0 0.0
    %1110 = vmatmul.mubr.f32.gmra.mrb[0].mxu0 %v746
    %v1111 = vpop.f32.mrb[0].mxu0
    %v1112 = vadd.f32 %v580, %v1111
    %v1113 = vpop.f32.mrb[0].mxu0
    %1114 = vmatprep.mubr.f32.mxu0 0.0
    %1115 = vmatmul.mubr.f32.gmra.mrb[0].mxu0 %v749
    %v1116 = vpop.f32.mrb[0].mxu0
    %v1117 = vadd.f32 %v580, %v1116
    %v1118 = vpop.f32.mrb[0].mxu0
    %1119 = vmatprep.mubr.f32.mxu0 0.0
    %1120 = vmatmul.mubr.f32.gmra.mrb[0].mxu0 %v752
    %v1121 = vpop.f32.mrb[0].mxu0
    %v1122 = vadd.f32 %v580, %v1121
    %v1123 = vpop.f32.mrb[0].mxu0
    %1124 = vmatprep.mubr.f32.mxu0 0.0
    %1125 = vmatmul.mubr.f32.gmra.mrb[0].mxu0 %v755
    %v1126 = vpop.f32.mrb[0].mxu0
    %v1127 = vadd.f32 %v580, %v1126
    %v1128 = vpop.f32.mrb[0].mxu0
    %1129 = vmatprep.mubr.f32.mxu0 0.0
    %1130 = vmatmul.mubr.f32.gmra.mrb[0].mxu0 %v758
    %v1131 = vpop.f32.mrb[0].mxu0
    %v1132 = vadd.f32 %v580, %v1131
    %v1133 = vpop.f32.mrb[0].mxu0
    %1134 = vmatprep.mubr.f32.mxu0 0.0
    %1135 = vmatmul.mubr.f32.gmra.mrb[0].mxu0 %v761
    %v1136 = vpop.f32.mrb[0].mxu0
    %v1137 = vadd.f32 %v580, %v1136
    %v1138 = vpop.f32.mrb[0].mxu0
    %1139 = vmatprep.mubr.f32.mxu0 0.0
    %1140 = vmatmul.mubr.f32.gmra.mrb[0].mxu0 %v764
    %v1141 = vpop.f32.mrb[0].mxu0
    %v1142 = vadd.f32 %v580, %v1141
    %v1143 = vpop.f32.mrb[0].mxu0
    %1144 = vmatprep.mubr.f32.mxu0 0.0
    %1145 = vmatmul.mubr.f32.gmra.mrb[0].mxu0 %v767
    %v1146 = vpop.f32.mrb[0].mxu0
    %v1147 = vadd.f32 %v580, %v1146
    %v1148 = vpop.f32.mrb[0].mxu0
    %1149 = vmatprep.mubr.f32.mxu0 0.0
    %1150 = vmatmul.mubr.f32.gmra.mrb[0].mxu0 %v770
    %v1151 = vpop.f32.mrb[0].mxu0
    %v1152 = vadd.f32 %v580, %v1151
    %v1153 = vpop.f32.mrb[0].mxu0
    %1154 = vmatprep.mubr.f32.mxu0 0.0
    %1155 = vmatmul.mubr.f32.gmra.mrb[0].mxu0 %v773
    %v1156 = vpop.f32.mrb[0].mxu0
    %v1157 = vadd.f32 %v580, %v1156
    %v1158 = vpop.f32.mrb[0].mxu0
    %1159 = vdwg.mxu0
    %v1160 = vxor.u32 %v842, 2147483648
    %v1161 = vxor.u32 %v847, 2147483648
    %v1162 = vxor.u32 %v852, 2147483648
    %v1163 = vxor.u32 %v857, 2147483648
    %v1164 = vxor.u32 %v862, 2147483648
    %v1165 = vxor.u32 %v867, 2147483648
    %v1166 = vxor.u32 %v872, 2147483648
    %v1167 = vxor.u32 %v877, 2147483648
    %v1168 = vxor.u32 %v882, 2147483648
    %v1169 = vxor.u32 %v887, 2147483648
    %v1170 = vxor.u32 %v892, 2147483648
    %v1171 = vxor.u32 %v897, 2147483648
    %v1172 = vxor.u32 %v902, 2147483648
    %v1173 = vxor.u32 %v907, 2147483648
    %v1174 = vxor.u32 %v912, 2147483648
    %v1175 = vxor.u32 %v917, 2147483648
    %v1176 = vxor.u32 %v922, 2147483648
    %v1177 = vxor.u32 %v927, 2147483648
    %v1178 = vxor.u32 %v932, 2147483648
    %v1179 = vxor.u32 %v937, 2147483648
    %v1180 = vxor.u32 %v942, 2147483648
    %v1181 = vxor.u32 %v947, 2147483648
    %v1182 = vxor.u32 %v952, 2147483648
    %v1183 = vxor.u32 %v957, 2147483648
    %v1184 = vxor.u32 %v962, 2147483648
    %v1185 = vxor.u32 %v967, 2147483648
    %v1186 = vxor.u32 %v972, 2147483648
    %v1187 = vxor.u32 %v977, 2147483648
    %v1188 = vxor.u32 %v982, 2147483648
    %v1189 = vxor.u32 %v987, 2147483648
    %v1190 = vxor.u32 %v992, 2147483648
    %v1191 = vxor.u32 %v997, 2147483648
    %v1192 = vxor.u32 %v1002, 2147483648
    %v1193 = vxor.u32 %v1007, 2147483648
    %v1194 = vxor.u32 %v1012, 2147483648
    %v1195 = vxor.u32 %v1017, 2147483648
    %v1196 = vxor.u32 %v1022, 2147483648
    %v1197 = vxor.u32 %v1027, 2147483648
    %v1198 = vxor.u32 %v1032, 2147483648
    %v1199 = vxor.u32 %v1037, 2147483648
    %v1200 = vxor.u32 %v1042, 2147483648
    %v1201 = vxor.u32 %v1047, 2147483648
    %v1202 = vxor.u32 %v1052, 2147483648
    %v1203 = vxor.u32 %v1057, 2147483648
    %v1204 = vxor.u32 %v1062, 2147483648
    %v1205 = vxor.u32 %v1067, 2147483648
    %v1206 = vxor.u32 %v1072, 2147483648
    %v1207 = vxor.u32 %v1077, 2147483648
    %v1208 = vxor.u32 %v1082, 2147483648
    %v1209 = vxor.u32 %v1087, 2147483648
    %v1210 = vxor.u32 %v1092, 2147483648
    %v1211 = vxor.u32 %v1097, 2147483648
    %v1212 = vxor.u32 %v1102, 2147483648
    %v1213 = vxor.u32 %v1107, 2147483648
    %v1214 = vxor.u32 %v1112, 2147483648
    %v1215 = vxor.u32 %v1117, 2147483648
    %v1216 = vxor.u32 %v1122, 2147483648
    %v1217 = vxor.u32 %v1127, 2147483648
    %v1218 = vxor.u32 %v1132, 2147483648
    %v1219 = vxor.u32 %v1137, 2147483648
    %v1220 = vxor.u32 %v1142, 2147483648
    %v1221 = vxor.u32 %v1147, 2147483648
    %v1222 = vxor.u32 %v1152, 2147483648
    %v1223 = vxor.u32 %v1157, 2147483648
    %v1224 = vmul.f32 %v1160, 1.442695
    %v1225 = vpow.pop %v1224
    %v1226 = vmul.f32 %v1161, 1.442695
    %v1227 = vpow.pop %v1226
    %v1228 = vmul.f32 %v1162, 1.442695
    %v1229 = vpow.pop %v1228
    %v1230 = vmul.f32 %v1163, 1.442695
    %v1231 = vpow.pop %v1230
    %v1232 = vmul.f32 %v1164, 1.442695
    %v1233 = vpow.pop %v1232
    %v1234 = vmul.f32 %v1165, 1.442695
    %v1235 = vpow.pop %v1234
    %v1236 = vmul.f32 %v1166, 1.442695
    %v1237 = vpow.pop %v1236
    %v1238 = vmul.f32 %v1167, 1.442695
    %v1239 = vpow.pop %v1238
    %v1240 = vmul.f32 %v1168, 1.442695
    %v1241 = vpow.pop %v1240
    %v1242 = vmul.f32 %v1169, 1.442695
    %v1243 = vpow.pop %v1242
    %v1244 = vmul.f32 %v1170, 1.442695
    %v1245 = vpow.pop %v1244
    %v1246 = vmul.f32 %v1171, 1.442695
    %v1247 = vpow.pop %v1246
    %v1248 = vmul.f32 %v1172, 1.442695
    %v1249 = vpow.pop %v1248
    %v1250 = vmul.f32 %v1173, 1.442695
    %v1251 = vpow.pop %v1250
    %v1252 = vmul.f32 %v1174, 1.442695
    %v1253 = vpow.pop %v1252
    %v1254 = vmul.f32 %v1175, 1.442695
    %v1255 = vpow.pop %v1254
    %v1256 = vmul.f32 %v1176, 1.442695
    %v1257 = vpow.pop %v1256
    %v1258 = vmul.f32 %v1177, 1.442695
    %v1259 = vpow.pop %v1258
    %v1260 = vmul.f32 %v1178, 1.442695
    %v1261 = vpow.pop %v1260
    %v1262 = vmul.f32 %v1179, 1.442695
    %v1263 = vpow.pop %v1262
    %v1264 = vmul.f32 %v1180, 1.442695
    %v1265 = vpow.pop %v1264
    %v1266 = vmul.f32 %v1181, 1.442695
    %v1267 = vpow.pop %v1266
    %v1268 = vmul.f32 %v1182, 1.442695
    %v1269 = vpow.pop %v1268
    %v1270 = vmul.f32 %v1183, 1.442695
    %v1271 = vpow.pop %v1270
    %v1272 = vmul.f32 %v1184, 1.442695
    %v1273 = vpow.pop %v1272
    %v1274 = vmul.f32 %v1185, 1.442695
    %v1275 = vpow.pop %v1274
    %v1276 = vmul.f32 %v1186, 1.442695
    %v1277 = vpow.pop %v1276
    %v1278 = vmul.f32 %v1187, 1.442695
    %v1279 = vpow.pop %v1278
    %v1280 = vmul.f32 %v1188, 1.442695
    %v1281 = vpow.pop %v1280
    %v1282 = vmul.f32 %v1189, 1.442695
    %v1283 = vpow.pop %v1282
    %v1284 = vmul.f32 %v1190, 1.442695
    %v1285 = vpow.pop %v1284
    %v1286 = vmul.f32 %v1191, 1.442695
    %v1287 = vpow.pop %v1286
    %v1288 = vmul.f32 %v1192, 1.442695
    %v1289 = vpow.pop %v1288
    %v1290 = vmul.f32 %v1193, 1.442695
    %v1291 = vpow.pop %v1290
    %v1292 = vmul.f32 %v1194, 1.442695
    %v1293 = vpow.pop %v1292
    %v1294 = vmul.f32 %v1195, 1.442695
    %v1295 = vpow.pop %v1294
    %v1296 = vmul.f32 %v1196, 1.442695
    %v1297 = vpow.pop %v1296
    %v1298 = vmul.f32 %v1197, 1.442695
    %v1299 = vpow.pop %v1298
    %v1300 = vmul.f32 %v1198, 1.442695
    %v1301 = vpow.pop %v1300
    %v1302 = vmul.f32 %v1199, 1.442695
    %v1303 = vpow.pop %v1302
    %v1304 = vmul.f32 %v1200, 1.442695
    %v1305 = vpow.pop %v1304
    %v1306 = vmul.f32 %v1201, 1.442695
    %v1307 = vpow.pop %v1306
    %v1308 = vmul.f32 %v1202, 1.442695
    %v1309 = vpow.pop %v1308
    %v1310 = vmul.f32 %v1203, 1.442695
    %v1311 = vpow.pop %v1310
    %v1312 = vmul.f32 %v1204, 1.442695
    %v1313 = vpow.pop %v1312
    %v1314 = vmul.f32 %v1205, 1.442695
    %v1315 = vpow.pop %v1314
    %v1316 = vmul.f32 %v1206, 1.442695
    %v1317 = vpow.pop %v1316
    %v1318 = vmul.f32 %v1207, 1.442695
    %v1319 = vpow.pop %v1318
    %v1320 = vmul.f32 %v1208, 1.442695
    %v1321 = vpow.pop %v1320
    %v1322 = vmul.f32 %v1209, 1.442695
    %v1323 = vpow.pop %v1322
    %v1324 = vmul.f32 %v1210, 1.442695
    %v1325 = vpow.pop %v1324
    %v1326 = vmul.f32 %v1211, 1.442695
    %v1327 = vpow.pop %v1326
    %v1328 = vmul.f32 %v1212, 1.442695
    %v1329 = vpow.pop %v1328
    %v1330 = vmul.f32 %v1213, 1.442695
    %v1331 = vpow.pop %v1330
    %v1332 = vmul.f32 %v1214, 1.442695
    %v1333 = vpow.pop %v1332
    %v1334 = vmul.f32 %v1215, 1.442695
    %v1335 = vpow.pop %v1334
    %v1336 = vmul.f32 %v1216, 1.442695
    %v1337 = vpow.pop %v1336
    %v1338 = vmul.f32 %v1217, 1.442695
    %v1339 = vpow.pop %v1338
    %v1340 = vmul.f32 %v1218, 1.442695
    %v1341 = vpow.pop %v1340
    %v1342 = vmul.f32 %v1219, 1.442695
    %v1343 = vpow.pop %v1342
    %v1344 = vmul.f32 %v1220, 1.442695
    %v1345 = vpow.pop %v1344
    %v1346 = vmul.f32 %v1221, 1.442695
    %v1347 = vpow.pop %v1346
    %v1348 = vmul.f32 %v1222, 1.442695
    %v1349 = vpow.pop %v1348
    %v1350 = vmul.f32 %v1223, 1.442695
    %v1351 = vpow.pop %v1350
    %v1352 = vadd.f32 %v1225, 1.0
    %v1353 = vadd.f32 %v1227, 1.0
    %v1354 = vadd.f32 %v1229, 1.0
    %v1355 = vadd.f32 %v1231, 1.0
    %v1356 = vadd.f32 %v1233, 1.0
    %v1357 = vadd.f32 %v1235, 1.0
    %v1358 = vadd.f32 %v1237, 1.0
    %v1359 = vadd.f32 %v1239, 1.0
    %v1360 = vadd.f32 %v1241, 1.0
    %v1361 = vadd.f32 %v1243, 1.0
    %v1362 = vadd.f32 %v1245, 1.0
    %v1363 = vadd.f32 %v1247, 1.0
    %v1364 = vadd.f32 %v1249, 1.0
    %v1365 = vadd.f32 %v1251, 1.0
    %v1366 = vadd.f32 %v1253, 1.0
    %v1367 = vadd.f32 %v1255, 1.0
    %v1368 = vadd.f32 %v1257, 1.0
    %v1369 = vadd.f32 %v1259, 1.0
    %v1370 = vadd.f32 %v1261, 1.0
    %v1371 = vadd.f32 %v1263, 1.0
    %v1372 = vadd.f32 %v1265, 1.0
    %v1373 = vadd.f32 %v1267, 1.0
    %v1374 = vadd.f32 %v1269, 1.0
    %v1375 = vadd.f32 %v1271, 1.0
    %v1376 = vadd.f32 %v1273, 1.0
    %v1377 = vadd.f32 %v1275, 1.0
    %v1378 = vadd.f32 %v1277, 1.0
    %v1379 = vadd.f32 %v1279, 1.0
    %v1380 = vadd.f32 %v1281, 1.0
    %v1381 = vadd.f32 %v1283, 1.0
    %v1382 = vadd.f32 %v1285, 1.0
    %v1383 = vadd.f32 %v1287, 1.0
    %v1384 = vadd.f32 %v1289, 1.0
    %v1385 = vadd.f32 %v1291, 1.0
    %v1386 = vadd.f32 %v1293, 1.0
    %v1387 = vadd.f32 %v1295, 1.0
    %v1388 = vadd.f32 %v1297, 1.0
    %v1389 = vadd.f32 %v1299, 1.0
    %v1390 = vadd.f32 %v1301, 1.0
    %v1391 = vadd.f32 %v1303, 1.0
    %v1392 = vadd.f32 %v1305, 1.0
    %v1393 = vadd.f32 %v1307, 1.0
    %v1394 = vadd.f32 %v1309, 1.0
    %v1395 = vadd.f32 %v1311, 1.0
    %v1396 = vadd.f32 %v1313, 1.0
    %v1397 = vadd.f32 %v1315, 1.0
    %v1398 = vadd.f32 %v1317, 1.0
    %v1399 = vadd.f32 %v1319, 1.0
    %v1400 = vadd.f32 %v1321, 1.0
    %v1401 = vadd.f32 %v1323, 1.0
    %v1402 = vadd.f32 %v1325, 1.0
    %v1403 = vadd.f32 %v1327, 1.0
    %v1404 = vadd.f32 %v1329, 1.0
    %v1405 = vadd.f32 %v1331, 1.0
    %v1406 = vadd.f32 %v1333, 1.0
    %v1407 = vadd.f32 %v1335, 1.0
    %v1408 = vadd.f32 %v1337, 1.0
    %v1409 = vadd.f32 %v1339, 1.0
    %v1410 = vadd.f32 %v1341, 1.0
    %v1411 = vadd.f32 %v1343, 1.0
    %v1412 = vadd.f32 %v1345, 1.0
    %v1413 = vadd.f32 %v1347, 1.0
    %v1414 = vadd.f32 %v1349, 1.0
    %v1415 = vadd.f32 %v1351, 1.0
    %v1416 = vrcp.pop %v1352
    %v1417 = vmul.f32 1.0, %v1416
    %v1418 = vrcp.pop %v1353
    %v1419 = vmul.f32 1.0, %v1418
    %v1420 = vrcp.pop %v1354
    %v1421 = vmul.f32 1.0, %v1420
    %v1422 = vrcp.pop %v1355
    %v1423 = vmul.f32 1.0, %v1422
    %v1424 = vrcp.pop %v1356
    %v1425 = vmul.f32 1.0, %v1424
    %v1426 = vrcp.pop %v1357
    %v1427 = vmul.f32 1.0, %v1426
    %v1428 = vrcp.pop %v1358
    %v1429 = vmul.f32 1.0, %v1428
    %v1430 = vrcp.pop %v1359
    %v1431 = vmul.f32 1.0, %v1430
    %v1432 = vrcp.pop %v1360
    %v1433 = vmul.f32 1.0, %v1432
    %v1434 = vrcp.pop %v1361
    %v1435 = vmul.f32 1.0, %v1434
    %v1436 = vrcp.pop %v1362
    %v1437 = vmul.f32 1.0, %v1436
    %v1438 = vrcp.pop %v1363
    %v1439 = vmul.f32 1.0, %v1438
    %v1440 = vrcp.pop %v1364
    %v1441 = vmul.f32 1.0, %v1440
    %v1442 = vrcp.pop %v1365
    %v1443 = vmul.f32 1.0, %v1442
    %v1444 = vrcp.pop %v1366
    %v1445 = vmul.f32 1.0, %v1444
    %v1446 = vrcp.pop %v1367
    %v1447 = vmul.f32 1.0, %v1446
    %v1448 = vrcp.pop %v1368
    %v1449 = vmul.f32 1.0, %v1448
    %v1450 = vrcp.pop %v1369
    %v1451 = vmul.f32 1.0, %v1450
    %v1452 = vrcp.pop %v1370
    %v1453 = vmul.f32 1.0, %v1452
    %v1454 = vrcp.pop %v1371
    %v1455 = vmul.f32 1.0, %v1454
    %v1456 = vrcp.pop %v1372
    %v1457 = vmul.f32 1.0, %v1456
    %v1458 = vrcp.pop %v1373
    %v1459 = vmul.f32 1.0, %v1458
    %v1460 = vrcp.pop %v1374
    %v1461 = vmul.f32 1.0, %v1460
    %v1462 = vrcp.pop %v1375
    %v1463 = vmul.f32 1.0, %v1462
    %v1464 = vrcp.pop %v1376
    %v1465 = vmul.f32 1.0, %v1464
    %v1466 = vrcp.pop %v1377
    %v1467 = vmul.f32 1.0, %v1466
    %v1468 = vrcp.pop %v1378
    %v1469 = vmul.f32 1.0, %v1468
    %v1470 = vrcp.pop %v1379
    %v1471 = vmul.f32 1.0, %v1470
    %v1472 = vrcp.pop %v1380
    %v1473 = vmul.f32 1.0, %v1472
    %v1474 = vrcp.pop %v1381
    %v1475 = vmul.f32 1.0, %v1474
    %v1476 = vrcp.pop %v1382
    %v1477 = vmul.f32 1.0, %v1476
    %v1478 = vrcp.pop %v1383
    %v1479 = vmul.f32 1.0, %v1478
    %v1480 = vrcp.pop %v1384
    %v1481 = vmul.f32 1.0, %v1480
    %v1482 = vrcp.pop %v1385
    %v1483 = vmul.f32 1.0, %v1482
    %v1484 = vrcp.pop %v1386
    %v1485 = vmul.f32 1.0, %v1484
    %v1486 = vrcp.pop %v1387
    %v1487 = vmul.f32 1.0, %v1486
    %v1488 = vrcp.pop %v1388
    %v1489 = vmul.f32 1.0, %v1488
    %v1490 = vrcp.pop %v1389
    %v1491 = vmul.f32 1.0, %v1490
    %v1492 = vrcp.pop %v1390
    %v1493 = vmul.f32 1.0, %v1492
    %v1494 = vrcp.pop %v1391
    %v1495 = vmul.f32 1.0, %v1494
    %v1496 = vrcp.pop %v1392
    %v1497 = vmul.f32 1.0, %v1496
    %v1498 = vrcp.pop %v1393
    %v1499 = vmul.f32 1.0, %v1498
    %v1500 = vrcp.pop %v1394
    %v1501 = vmul.f32 1.0, %v1500
    %v1502 = vrcp.pop %v1395
    %v1503 = vmul.f32 1.0, %v1502
    %v1504 = vrcp.pop %v1396
    %v1505 = vmul.f32 1.0, %v1504
    %v1506 = vrcp.pop %v1397
    %v1507 = vmul.f32 1.0, %v1506
    %v1508 = vrcp.pop %v1398
    %v1509 = vmul.f32 1.0, %v1508
    %v1510 = vrcp.pop %v1399
    %v1511 = vmul.f32 1.0, %v1510
    %v1512 = vrcp.pop %v1400
    %v1513 = vmul.f32 1.0, %v1512
    %v1514 = vrcp.pop %v1401
    %v1515 = vmul.f32 1.0, %v1514
    %v1516 = vrcp.pop %v1402
    %v1517 = vmul.f32 1.0, %v1516
    %v1518 = vrcp.pop %v1403
    %v1519 = vmul.f32 1.0, %v1518
    %v1520 = vrcp.pop %v1404
    %v1521 = vmul.f32 1.0, %v1520
    %v1522 = vrcp.pop %v1405
    %v1523 = vmul.f32 1.0, %v1522
    %v1524 = vrcp.pop %v1406
    %v1525 = vmul.f32 1.0, %v1524
    %v1526 = vrcp.pop %v1407
    %v1527 = vmul.f32 1.0, %v1526
    %v1528 = vrcp.pop %v1408
    %v1529 = vmul.f32 1.0, %v1528
    %v1530 = vrcp.pop %v1409
    %v1531 = vmul.f32 1.0, %v1530
    %v1532 = vrcp.pop %v1410
    %v1533 = vmul.f32 1.0, %v1532
    %v1534 = vrcp.pop %v1411
    %v1535 = vmul.f32 1.0, %v1534
    %v1536 = vrcp.pop %v1412
    %v1537 = vmul.f32 1.0, %v1536
    %v1538 = vrcp.pop %v1413
    %v1539 = vmul.f32 1.0, %v1538
    %v1540 = vrcp.pop %v1414
    %v1541 = vmul.f32 1.0, %v1540
    %v1542 = vrcp.pop %v1415
    %v1543 = vmul.f32 1.0, %v1542
    %1544 = vst [vmem:[#allocation5] sm:$0xff] %v1417
    %1545 = vst [vmem:[#allocation5 + $0x8] sm:$0xff] %v1419
    %1546 = vst [vmem:[#allocation5 + $0x10] sm:$0xff] %v1421
    %1547 = vst [vmem:[#allocation5 + $0x18] sm:$0xff] %v1423
    %1548 = vst [vmem:[#allocation5 + $0x20] sm:$0xff] %v1425
    %1549 = vst [vmem:[#allocation5 + $0x28] sm:$0xff] %v1427
    %1550 = vst [vmem:[#allocation5 + $0x30] sm:$0xff] %v1429
    %1551 = vst [vmem:[#allocation5 + $0x38] sm:$0xff] %v1431
    %1552 = vst [vmem:[#allocation5 + $0x40] sm:$0xff] %v1433
    %1553 = vst [vmem:[#allocation5 + $0x48] sm:$0xff] %v1435
    %1554 = vst [vmem:[#allocation5 + $0x50] sm:$0xff] %v1437
    %1555 = vst [vmem:[#allocation5 + $0x58] sm:$0xff] %v1439
    %1556 = vst [vmem:[#allocation5 + $0x60] sm:$0xff] %v1441
    %1557 = vst [vmem:[#allocation5 + $0x68] sm:$0xff] %v1443
    %1558 = vst [vmem:[#allocation5 + $0x70] sm:$0xff] %v1445
    %1559 = vst [vmem:[#allocation5 + $0x78] sm:$0xff] %v1447
    %1560 = vst [vmem:[#allocation5 + $0x80] sm:$0xff] %v1449
    %1561 = vst [vmem:[#allocation5 + $0x88] sm:$0xff] %v1451
    %1562 = vst [vmem:[#allocation5 + $0x90] sm:$0xff] %v1453
    %1563 = vst [vmem:[#allocation5 + $0x98] sm:$0xff] %v1455
    %1564 = vst [vmem:[#allocation5 + $0xa0] sm:$0xff] %v1457
    %1565 = vst [vmem:[#allocation5 + $0xa8] sm:$0xff] %v1459
    %1566 = vst [vmem:[#allocation5 + $0xb0] sm:$0xff] %v1461
    %1567 = vst [vmem:[#allocation5 + $0xb8] sm:$0xff] %v1463
    %1568 = vst [vmem:[#allocation5 + $0xc0] sm:$0xff] %v1465
    %1569 = vst [vmem:[#allocation5 + $0xc8] sm:$0xff] %v1467
    %1570 = vst [vmem:[#allocation5 + $0xd0] sm:$0xff] %v1469
    %1571 = vst [vmem:[#allocation5 + $0xd8] sm:$0xff] %v1471
    %1572 = vst [vmem:[#allocation5 + $0xe0] sm:$0xff] %v1473
    %1573 = vst [vmem:[#allocation5 + $0xe8] sm:$0xff] %v1475
    %1574 = vst [vmem:[#allocation5 + $0xf0] sm:$0xff] %v1477
    %1575 = vst [vmem:[#allocation5 + $0xf8] sm:$0xff] %v1479
    %1576 = vst [vmem:[#allocation5 + $0x100] sm:$0xff] %v1481
    %1577 = vst [vmem:[#allocation5 + $0x108] sm:$0xff] %v1483
    %1578 = vst [vmem:[#allocation5 + $0x110] sm:$0xff] %v1485
    %1579 = vst [vmem:[#allocation5 + $0x118] sm:$0xff] %v1487
    %1580 = vst [vmem:[#allocation5 + $0x120] sm:$0xff] %v1489
    %1581 = vst [vmem:[#allocation5 + $0x128] sm:$0xff] %v1491
    %1582 = vst [vmem:[#allocation5 + $0x130] sm:$0xff] %v1493
    %1583 = vst [vmem:[#allocation5 + $0x138] sm:$0xff] %v1495
    %1584 = vst [vmem:[#allocation5 + $0x140] sm:$0xff] %v1497
    %1585 = vst [vmem:[#allocation5 + $0x148] sm:$0xff] %v1499
    %1586 = vst [vmem:[#allocation5 + $0x150] sm:$0xff] %v1501
    %1587 = vst [vmem:[#allocation5 + $0x158] sm:$0xff] %v1503
    %1588 = vst [vmem:[#allocation5 + $0x160] sm:$0xff] %v1505
    %1589 = vst [vmem:[#allocation5 + $0x168] sm:$0xff] %v1507
    %1590 = vst [vmem:[#allocation5 + $0x170] sm:$0xff] %v1509
    %1591 = vst [vmem:[#allocation5 + $0x178] sm:$0xff] %v1511
    %1592 = vst [vmem:[#allocation5 + $0x180] sm:$0xff] %v1513
    %1593 = vst [vmem:[#allocation5 + $0x188] sm:$0xff] %v1515
    %1594 = vst [vmem:[#allocation5 + $0x190] sm:$0xff] %v1517
    %1595 = vst [vmem:[#allocation5 + $0x198] sm:$0xff] %v1519
    %1596 = vst [vmem:[#allocation5 + $0x1a0] sm:$0xff] %v1521
    %1597 = vst [vmem:[#allocation5 + $0x1a8] sm:$0xff] %v1523
    %1598 = vst [vmem:[#allocation5 + $0x1b0] sm:$0xff] %v1525
    %1599 = vst [vmem:[#allocation5 + $0x1b8] sm:$0xff] %v1527
    %1600 = vst [vmem:[#allocation5 + $0x1c0] sm:$0xff] %v1529
    %1601 = vst [vmem:[#allocation5 + $0x1c8] sm:$0xff] %v1531
    %1602 = vst [vmem:[#allocation5 + $0x1d0] sm:$0xff] %v1533
    %1603 = vst [vmem:[#allocation5 + $0x1d8] sm:$0xff] %v1535
    %1604 = vst [vmem:[#allocation5 + $0x1e0] sm:$0xff] %v1537
    %1605 = vst [vmem:[#allocation5 + $0x1e8] sm:$0xff] %v1539
    %1606 = vst [vmem:[#allocation5 + $0x1f0] sm:$0xff] %v1541
    %1607 = vst [vmem:[#allocation5 + $0x1f8] sm:$0xff] %v1543
    // Predicated region
    $region26: #{tpu_custom_call.1} parent=1 // pred_check
      _
    $region27: #{tpu_custom_call.1} parent=1 // pred_check_branch
      %1609 = sbr.rel (0) target = $region29
    $region28: #{tpu_custom_call.1} parent=1 // pred_region
      %s1611 = ssub.s32 8192, 8192
      %1612 = vsyncadd [#allocation4], %s1611
      %s1613 = sshll.u32 [#allocation5], 4
      %s1614 = int_to_ptr.vmem [resolvable:$true] %s1613
      %1619 = dma.vmem_to_hbm [thread:$0]  %s1614, 8192, %s5, [#allocation4], 128, 128, 8
    $region29: #{tpu_custom_call.1} parent=1 // pred_fallthru
      _
    // Predicated region
    $region30: #{tpu_custom_call.1} parent=1 // pred_check
      _
    $region31: #{tpu_custom_call.1} parent=1 // pred_check_branch
      %1621 = sbr.rel (0) target = $region33
    $region32: #{tpu_custom_call.1} parent=1 // pred_region
      %1622 = dma.done [#allocation4], 8192
    $region33: #{tpu_custom_call.1} parent=1 // pred_fallthru
      _
    %1623 = vsyncpa [#allocation3], 1
    %1624 = vsyncpa [#allocation4], 1

</llo_original>
